<compile_context>
chip_gen: v5e
topology: v5e:2x2
jax: 0.10.0
libtpu: 0.0.40
codegen_flags: <defaults>
</compile_context>

<pallas_src>
import numpy as np
import jax
import jax.numpy as jnp
from jax.experimental import pallas as pl
from jax.experimental.pallas import tpu as pltpu

# ---- "CFG" (synthetic, deterministic) --------------------------------------
SYSTEM_SIZE = 3          # CFG.system_size
EXTRA_ANCILLA = False    # CFG.extra_ancilla
ANCILLA_MODE = "none"    # CFG.ancilla_mode
SIZE = SYSTEM_SIZE * 2 + (1 if (EXTRA_ANCILLA and ANCILLA_MODE == "pass") else 0)
DIM = 2 ** SIZE          # 2^6 = 64
NUM_HERM = 4             # [I, X, Y, Z]
LANES = 128              # TPU vreg lane width


def _discriminator_kernel(alpha_ref, beta_ref,
                          psi_re_ref, psi_im_ref, phi_re_ref, phi_im_ref):
    """Elementwise Kronecker construction of psi and phi for batch element b.

    alpha_ref, beta_ref: (B, SIZE, 4) float32 in SMEM (scalar reads).
    *_re_ref / *_im_ref: (1, DIM*DIM//LANES, LANES) float32 blocks in VMEM
                         (row-major flat layout of the (DIM, DIM) plane).
    """
    b = pl.program_id(0)
    n = alpha_ref.shape[1]                 # SIZE (static)
    nrows = psi_re_ref.shape[1]
    lanes = psi_re_ref.shape[2]
    lane_bits = lanes.bit_length() - 1     # log2(lanes); lanes is a power of 2

    # 1-D index generators: flat index p = srow*lanes + lane.
    lane = jax.lax.broadcasted_iota(jnp.int32, (1, lanes), 1)    # lane-only
    srow = jax.lax.broadcasted_iota(jnp.int32, (nrows, 1), 0)    # sublane/row-only

    def p_bit(k):
        """Boolean mask of bit k of the flat element index p (small 1-D shape)."""
        if k < lane_bits:
            return ((lane >> k) & 1) != 0          # (1, lanes)
        return ((srow >> (k - lane_bits)) & 1) != 0  # (nrows, 1)

    def build(coef_ref):
        """Real/imag planes of kron_i (c0*I + c1*X + c2*Y + c3*Z) for row b."""
        acc_re = acc_im = None
        # static python loop: SIZE is a compile-time constant (fully unrolled)
        for i in range(n):
            shift = n - 1 - i                 # first kron factor == MSB
            bc = p_bit(shift)                 # column bit
            br = p_bit(shift + n)             # row bit
            diag = br == bc
            a0 = coef_ref[b, i, 0]            # coeff of I (SMEM scalar reads)
            a1 = coef_ref[b, i, 1]            # coeff of X
            a2 = coef_ref[b, i, 2]            # coeff of Y
            a3 = coef_ref[b, i, 3]            # coeff of Z
            # scalar-unit combos:
            #   M[0,0]=a0+a3  M[0,1]=a1-i*a2  M[1,0]=a1+i*a2  M[1,1]=a0-a3
            d0 = a0 + a3
            d1 = a0 - a3
            na2 = -a2
            m_diag_re = jnp.where(br, d1, d0)                 # small (row-bit shape)
            m_off_im = jnp.where(br, a2, na2)                 # small
            f_re = jnp.where(diag, m_diag_re, a1)
            f_im = jnp.where(diag, jnp.float32(0.0), m_off_im)
            if acc_re is None:
                # initialize accumulators directly from the first factor
                acc_re = jnp.broadcast_to(f_re, (nrows, lanes)).astype(jnp.float32)
                acc_im = jnp.broadcast_to(f_im, (nrows, lanes)).astype(jnp.float32)
            else:
                # complex multiply-accumulate of the running Kronecker element
                acc_re, acc_im = (acc_re * f_re - acc_im * f_im,
                                  acc_re * f_im + acc_im * f_re)
        return acc_re, acc_im

    # psi pass, stored before phi's accumulators go live (caps vreg pressure).
    psi_re, psi_im = build(alpha_ref)
    psi_re_ref[0] = psi_re
    psi_im_ref[0] = psi_im

    phi_re, phi_im = build(beta_ref)
    phi_re_ref[0] = phi_re
    phi_im_ref[0] = phi_im


def discriminator_forward(alpha, beta):
    """JAX wrapper.

    alpha, beta: (SIZE, 4) or (B, SIZE, 4) float32.
    Returns (psi, phi) complex64, shape (DIM, DIM) or (B, DIM, DIM).
    """
    squeeze = alpha.ndim == 2
    if squeeze:
        alpha = alpha[None]
        beta = beta[None]
    B, size, _ = alpha.shape
    dim = 2 ** size
    total = dim * dim
    # lane-dense flat layout when possible, else fall back to square planes
    lanes = LANES if total % LANES == 0 else dim
    nrows = total // lanes

    plane = jax.ShapeDtypeStruct((B, nrows, lanes), jnp.float32)
    out_spec = pl.BlockSpec((1, nrows, lanes), lambda b: (b, 0, 0))

    flops = B * 2 * total * (6 * max(size - 1, 0) + 4 * size)
    bytes_accessed = B * (4 * total * 4 + 2 * size * NUM_HERM * 4)

    psi_re, psi_im, phi_re, phi_im = pl.pallas_call(
        _discriminator_kernel,
        out_shape=(plane, plane, plane, plane),
        grid=(B,),
        in_specs=[
            pl.BlockSpec(memory_space=pltpu.MemorySpace.SMEM),
            pl.BlockSpec(memory_space=pltpu.MemorySpace.SMEM),
        ],
        out_specs=(out_spec, out_spec, out_spec, out_spec),
        compiler_params=pltpu.CompilerParams(
            dimension_semantics=("parallel",)),
        cost_estimate=pl.CostEstimate(
            flops=flops, transcendentals=0, bytes_accessed=bytes_accessed),
    )(alpha, beta)

    # free row-major reshape + one fused complex-assembly op per matrix
    psi = jax.lax.complex(psi_re.reshape(B, dim, dim), psi_im.reshape(B, dim, dim))
    phi = jax.lax.complex(phi_re.reshape(B, dim, dim), phi_im.reshape(B, dim, dim))
    if squeeze:
        psi, phi = psi[0], phi[0]
    return psi, phi


def _reference_forward(alpha, beta):
    """Pure numpy reference matching the PyTorch forward()."""
    I = np.eye(2, dtype=np.complex64)
    X = np.array([[0, 1], [1, 0]], dtype=np.complex64)
    Y = np.array([[0, -1j], [1j, 0]], dtype=np.complex64)
    Z = np.array([[1, 0], [0, -1]], dtype=np.complex64)
    herm = [I, X, Y, Z]
    a = np.asarray(alpha, dtype=np.float32)
    b = np.asarray(beta, dtype=np.float32)
    psi = np.array([[1.0 + 0j]], dtype=np.complex64)
    phi = np.array([[1.0 + 0j]], dtype=np.complex64)
    for i in range(a.shape[0]):
        psi_i = sum(a[i, j] * herm[j] for j in range(4))
        phi_i = sum(b[i, j] * herm[j] for j in range(4))
        psi = np.kron(psi, psi_i)
        phi = np.kron(phi, phi_i)
    return psi, phi


if __name__ == "__main__":
    # Deterministic parameter init (mirrors torch .uniform_(-1, 1) init shapes).
    key = jax.random.PRNGKey(0)
    k_a, k_b = jax.random.split(key)
    alpha = jax.random.uniform(k_a, (SIZE, NUM_HERM), jnp.float32, minval=-1.0, maxval=1.0)
    beta = jax.random.uniform(k_b, (SIZE, NUM_HERM), jnp.float32, minval=-1.0, maxval=1.0)

    # Single parameter set (module semantics).
    psi, phi = discriminator_forward(alpha, beta)
    jax.block_until_ready((psi, phi))

    psi_ref, phi_ref = _reference_forward(np.asarray(alpha), np.asarray(beta))
    assert psi.shape == (DIM, DIM) and phi.shape == (DIM, DIM)
    assert psi.dtype == jnp.complex64 and phi.dtype == jnp.complex64
    np.testing.assert_allclose(np.asarray(psi), psi_ref, rtol=1e-4, atol=1e-4)
    np.testing.assert_allclose(np.asarray(phi), phi_ref, rtol=1e-4, atol=1e-4)

    # Batched path: grid over B, parallel across TensorCores (v7x megacore).
    Bn = 4
    k_ab, k_bb = jax.random.split(jax.random.PRNGKey(0), 2)
    alpha_b = jax.random.uniform(k_ab, (Bn, SIZE, NUM_HERM), jnp.float32, minval=-1.0, maxval=1.0)
    beta_b = jax.random.uniform(k_bb, (Bn, SIZE, NUM_HERM), jnp.float32, minval=-1.0, maxval=1.0)
    psi_b, phi_b = discriminator_forward(alpha_b, beta_b)
    jax.block_until_ready((psi_b, phi_b))
    for bi in range(Bn):
        pr, fr = _reference_forward(np.asarray(alpha_b[bi]), np.asarray(beta_b[bi]))
        np.testing.assert_allclose(np.asarray(psi_b[bi]), pr, rtol=1e-4, atol=1e-4)
        np.testing.assert_allclose(np.asarray(phi_b[bi]), fr, rtol=1e-4, atol=1e-4)

    print("KERNEL_OK")
</pallas_src>

<mosaic_0001>
module attributes {stable_mosaic.version = 11 : i64} {
  func.func @_discriminator_kernel(%arg0: i32, %arg1: memref<1x6x4xf32, #tpu.memory_space<smem>>, %arg2: memref<1x6x4xf32, #tpu.memory_space<smem>>, %arg3: memref<1x32x128xf32, #tpu.memory_space<vmem>>, %arg4: memref<1x32x128xf32, #tpu.memory_space<vmem>>, %arg5: memref<1x32x128xf32, #tpu.memory_space<vmem>>, %arg6: memref<1x32x128xf32, #tpu.memory_space<vmem>>) attributes {dimension_semantics = [#tpu.dimension_semantics<parallel>], iteration_bounds = array<i64: 1>, scalar_prefetch = 0 : i64, scratch_operands = 0 : i64, tpu.core_type = #tpu.core_type<tc>, window_params = [{transform_indices = @transform_0, window_bounds = array<i64: 1, 6, 4>}, {transform_indices = @transform_1, window_bounds = array<i64: 1, 6, 4>}, {transform_indices = @transform_2, window_bounds = array<i64: 1, 32, 128>}, {transform_indices = @transform_3, window_bounds = array<i64: 1, 32, 128>}, {transform_indices = @transform_4, window_bounds = array<i64: 1, 32, 128>}, {transform_indices = @transform_5, window_bounds = array<i64: 1, 32, 128>}]} {
    %0 = tpu.iota {dimensions = array<i32: 1>} : vector<1x128xi32>
    %1 = tpu.iota {dimensions = array<i32: 0>} : vector<32x1xi32>
    %c5_i32 = arith.constant 5 : i32
    %2 = vector.broadcast %c5_i32 : i32 to vector<1x128xi32>
    %3 = arith.shrsi %0, %2 : vector<1x128xi32>
    %c1_i32 = arith.constant 1 : i32
    %4 = vector.broadcast %c1_i32 : i32 to vector<1x128xi32>
    %5 = arith.andi %3, %4 : vector<1x128xi32>
    %c0_i32 = arith.constant 0 : i32
    %6 = vector.broadcast %c0_i32 : i32 to vector<1x128xi32>
    %7 = arith.cmpi ne, %5, %6 : vector<1x128xi32>
    %c4_i32 = arith.constant 4 : i32
    %8 = vector.broadcast %c4_i32 : i32 to vector<32x1xi32>
    %9 = arith.shrsi %1, %8 : vector<32x1xi32>
    %c1_i32_0 = arith.constant 1 : i32
    %10 = vector.broadcast %c1_i32_0 : i32 to vector<32x1xi32>
    %11 = arith.andi %9, %10 : vector<32x1xi32>
    %c0_i32_1 = arith.constant 0 : i32
    %12 = vector.broadcast %c0_i32_1 : i32 to vector<32x1xi32>
    %13 = arith.cmpi ne, %11, %12 : vector<32x1xi32>
    %14 = vector.broadcast %13 : vector<32x1xi1> to vector<32x128xi1>
    %15 = vector.broadcast %7 : vector<1x128xi1> to vector<32x128xi1>
    %16 = vector.broadcast %14 : vector<32x128xi1> to vector<32x128xi1>
    %17 = vector.broadcast %15 : vector<32x128xi1> to vector<32x128xi1>
    %18 = arith.xori %16, %17 : vector<32x128xi1>
    %cst = arith.constant dense<true> : vector<32x128xi1>
    %19 = arith.xori %18, %cst : vector<32x128xi1>
    %20 = arith.index_cast %arg0 : i32 to index
    %c0 = arith.constant 0 : index
    %c0_2 = arith.constant 0 : index
    %21 = memref.load %arg1[%20, %c0, %c0_2] : memref<1x6x4xf32, #tpu.memory_space<smem>>
    %22 = arith.index_cast %arg0 : i32 to index
    %c0_3 = arith.constant 0 : index
    %c1 = arith.constant 1 : index
    %23 = memref.load %arg1[%22, %c0_3, %c1] : memref<1x6x4xf32, #tpu.memory_space<smem>>
    %24 = arith.index_cast %arg0 : i32 to index
    %c0_4 = arith.constant 0 : index
    %c2 = arith.constant 2 : index
    %25 = memref.load %arg1[%24, %c0_4, %c2] : memref<1x6x4xf32, #tpu.memory_space<smem>>
    %26 = arith.index_cast %arg0 : i32 to index
    %c0_5 = arith.constant 0 : index
    %c3 = arith.constant 3 : index
    %27 = memref.load %arg1[%26, %c0_5, %c3] : memref<1x6x4xf32, #tpu.memory_space<smem>>
    %28 = arith.addf %21, %27 : f32
    %29 = arith.subf %21, %27 : f32
    %cst_6 = arith.constant 0.000000e+00 : f32
    %30 = arith.subf %cst_6, %25 : f32
    %31 = vector.broadcast %29 : f32 to vector<32x1xf32>
    %32 = vector.broadcast %28 : f32 to vector<32x1xf32>
    %33 = arith.select %13, %31, %32 : vector<32x1xi1>, vector<32x1xf32>
    %34 = vector.broadcast %25 : f32 to vector<32x1xf32>
    %35 = vector.broadcast %30 : f32 to vector<32x1xf32>
    %36 = arith.select %13, %34, %35 : vector<32x1xi1>, vector<32x1xf32>
    %37 = vector.shape_cast %33 : vector<32x1xf32> to vector<32x1xf32>
    %38 = vector.broadcast %37 : vector<32x1xf32> to vector<32x128xf32>
    %39 = vector.broadcast %23 : f32 to vector<32x128xf32>
    %40 = arith.select %19, %38, %39 : vector<32x128xi1>, vector<32x128xf32>
    %cst_7 = arith.constant 0.000000e+00 : f32
    %41 = vector.broadcast %cst_7 : f32 to vector<32x128xf32>
    %42 = vector.shape_cast %36 : vector<32x1xf32> to vector<32x1xf32>
    %43 = vector.broadcast %42 : vector<32x1xf32> to vector<32x128xf32>
    %44 = arith.select %19, %41, %43 : vector<32x128xi1>, vector<32x128xf32>
    %c4_i32_8 = arith.constant 4 : i32
    %45 = vector.broadcast %c4_i32_8 : i32 to vector<1x128xi32>
    %46 = arith.shrsi %0, %45 : vector<1x128xi32>
    %c1_i32_9 = arith.constant 1 : i32
    %47 = vector.broadcast %c1_i32_9 : i32 to vector<1x128xi32>
    %48 = arith.andi %46, %47 : vector<1x128xi32>
    %c0_i32_10 = arith.constant 0 : i32
    %49 = vector.broadcast %c0_i32_10 : i32 to vector<1x128xi32>
    %50 = arith.cmpi ne, %48, %49 : vector<1x128xi32>
    %c3_i32 = arith.constant 3 : i32
    %51 = vector.broadcast %c3_i32 : i32 to vector<32x1xi32>
    %52 = arith.shrsi %1, %51 : vector<32x1xi32>
    %c1_i32_11 = arith.constant 1 : i32
    %53 = vector.broadcast %c1_i32_11 : i32 to vector<32x1xi32>
    %54 = arith.andi %52, %53 : vector<32x1xi32>
    %c0_i32_12 = arith.constant 0 : i32
    %55 = vector.broadcast %c0_i32_12 : i32 to vector<32x1xi32>
    %56 = arith.cmpi ne, %54, %55 : vector<32x1xi32>
    %57 = vector.broadcast %56 : vector<32x1xi1> to vector<32x128xi1>
    %58 = vector.broadcast %50 : vector<1x128xi1> to vector<32x128xi1>
    %59 = vector.broadcast %57 : vector<32x128xi1> to vector<32x128xi1>
    %60 = vector.broadcast %58 : vector<32x128xi1> to vector<32x128xi1>
    %61 = arith.xori %59, %60 : vector<32x128xi1>
    %cst_13 = arith.constant dense<true> : vector<32x128xi1>
    %62 = arith.xori %61, %cst_13 : vector<32x128xi1>
    %63 = arith.index_cast %arg0 : i32 to index
    %c1_14 = arith.constant 1 : index
    %c0_15 = arith.constant 0 : index
    %64 = memref.load %arg1[%63, %c1_14, %c0_15] : memref<1x6x4xf32, #tpu.memory_space<smem>>
    %65 = arith.index_cast %arg0 : i32 to index
    %c1_16 = arith.constant 1 : index
    %c1_17 = arith.constant 1 : index
    %66 = memref.load %arg1[%65, %c1_16, %c1_17] : memref<1x6x4xf32, #tpu.memory_space<smem>>
    %67 = arith.index_cast %arg0 : i32 to index
    %c1_18 = arith.constant 1 : index
    %c2_19 = arith.constant 2 : index
    %68 = memref.load %arg1[%67, %c1_18, %c2_19] : memref<1x6x4xf32, #tpu.memory_space<smem>>
    %69 = arith.index_cast %arg0 : i32 to index
    %c1_20 = arith.constant 1 : index
    %c3_21 = arith.constant 3 : index
    %70 = memref.load %arg1[%69, %c1_20, %c3_21] : memref<1x6x4xf32, #tpu.memory_space<smem>>
    %71 = arith.addf %64, %70 : f32
    %72 = arith.subf %64, %70 : f32
    %cst_22 = arith.constant 0.000000e+00 : f32
    %73 = arith.subf %cst_22, %68 : f32
    %74 = vector.broadcast %72 : f32 to vector<32x1xf32>
    %75 = vector.broadcast %71 : f32 to vector<32x1xf32>
    %76 = arith.select %56, %74, %75 : vector<32x1xi1>, vector<32x1xf32>
    %77 = vector.broadcast %68 : f32 to vector<32x1xf32>
    %78 = vector.broadcast %73 : f32 to vector<32x1xf32>
    %79 = arith.select %56, %77, %78 : vector<32x1xi1>, vector<32x1xf32>
    %80 = vector.shape_cast %76 : vector<32x1xf32> to vector<32x1xf32>
    %81 = vector.broadcast %80 : vector<32x1xf32> to vector<32x128xf32>
    %82 = vector.broadcast %66 : f32 to vector<32x128xf32>
    %83 = arith.select %62, %81, %82 : vector<32x128xi1>, vector<32x128xf32>
    %cst_23 = arith.constant 0.000000e+00 : f32
    %84 = vector.broadcast %cst_23 : f32 to vector<32x128xf32>
    %85 = vector.shape_cast %79 : vector<32x1xf32> to vector<32x1xf32>
    %86 = vector.broadcast %85 : vector<32x1xf32> to vector<32x128xf32>
    %87 = arith.select %62, %84, %86 : vector<32x128xi1>, vector<32x128xf32>
    %88 = arith.mulf %40, %83 : vector<32x128xf32>
    %89 = arith.mulf %44, %87 : vector<32x128xf32>
    %90 = arith.subf %88, %89 : vector<32x128xf32>
    %91 = arith.mulf %40, %87 : vector<32x128xf32>
    %92 = arith.mulf %44, %83 : vector<32x128xf32>
    %93 = arith.addf %91, %92 : vector<32x128xf32>
    %c3_i32_24 = arith.constant 3 : i32
    %94 = vector.broadcast %c3_i32_24 : i32 to vector<1x128xi32>
    %95 = arith.shrsi %0, %94 : vector<1x128xi32>
    %c1_i32_25 = arith.constant 1 : i32
    %96 = vector.broadcast %c1_i32_25 : i32 to vector<1x128xi32>
    %97 = arith.andi %95, %96 : vector<1x128xi32>
    %c0_i32_26 = arith.constant 0 : i32
    %98 = vector.broadcast %c0_i32_26 : i32 to vector<1x128xi32>
    %99 = arith.cmpi ne, %97, %98 : vector<1x128xi32>
    %c2_i32 = arith.constant 2 : i32
    %100 = vector.broadcast %c2_i32 : i32 to vector<32x1xi32>
    %101 = arith.shrsi %1, %100 : vector<32x1xi32>
    %c1_i32_27 = arith.constant 1 : i32
    %102 = vector.broadcast %c1_i32_27 : i32 to vector<32x1xi32>
    %103 = arith.andi %101, %102 : vector<32x1xi32>
    %c0_i32_28 = arith.constant 0 : i32
    %104 = vector.broadcast %c0_i32_28 : i32 to vector<32x1xi32>
    %105 = arith.cmpi ne, %103, %104 : vector<32x1xi32>
    %106 = vector.broadcast %105 : vector<32x1xi1> to vector<32x128xi1>
    %107 = vector.broadcast %99 : vector<1x128xi1> to vector<32x128xi1>
    %108 = vector.broadcast %106 : vector<32x128xi1> to vector<32x128xi1>
    %109 = vector.broadcast %107 : vector<32x128xi1> to vector<32x128xi1>
    %110 = arith.xori %108, %109 : vector<32x128xi1>
    %cst_29 = arith.constant dense<true> : vector<32x128xi1>
    %111 = arith.xori %110, %cst_29 : vector<32x128xi1>
    %112 = arith.index_cast %arg0 : i32 to index
    %c2_30 = arith.constant 2 : index
    %c0_31 = arith.constant 0 : index
    %113 = memref.load %arg1[%112, %c2_30, %c0_31] : memref<1x6x4xf32, #tpu.memory_space<smem>>
    %114 = arith.index_cast %arg0 : i32 to index
    %c2_32 = arith.constant 2 : index
    %c1_33 = arith.constant 1 : index
    %115 = memref.load %arg1[%114, %c2_32, %c1_33] : memref<1x6x4xf32, #tpu.memory_space<smem>>
    %116 = arith.index_cast %arg0 : i32 to index
    %c2_34 = arith.constant 2 : index
    %c2_35 = arith.constant 2 : index
    %117 = memref.load %arg1[%116, %c2_34, %c2_35] : memref<1x6x4xf32, #tpu.memory_space<smem>>
    %118 = arith.index_cast %arg0 : i32 to index
    %c2_36 = arith.constant 2 : index
    %c3_37 = arith.constant 3 : index
    %119 = memref.load %arg1[%118, %c2_36, %c3_37] : memref<1x6x4xf32, #tpu.memory_space<smem>>
    %120 = arith.addf %113, %119 : f32
    %121 = arith.subf %113, %119 : f32
    %cst_38 = arith.constant 0.000000e+00 : f32
    %122 = arith.subf %cst_38, %117 : f32
    %123 = vector.broadcast %121 : f32 to vector<32x1xf32>
    %124 = vector.broadcast %120 : f32 to vector<32x1xf32>
    %125 = arith.select %105, %123, %124 : vector<32x1xi1>, vector<32x1xf32>
    %126 = vector.broadcast %117 : f32 to vector<32x1xf32>
    %127 = vector.broadcast %122 : f32 to vector<32x1xf32>
    %128 = arith.select %105, %126, %127 : vector<32x1xi1>, vector<32x1xf32>
    %129 = vector.shape_cast %125 : vector<32x1xf32> to vector<32x1xf32>
    %130 = vector.broadcast %129 : vector<32x1xf32> to vector<32x128xf32>
    %131 = vector.broadcast %115 : f32 to vector<32x128xf32>
    %132 = arith.select %111, %130, %131 : vector<32x128xi1>, vector<32x128xf32>
    %cst_39 = arith.constant 0.000000e+00 : f32
    %133 = vector.broadcast %cst_39 : f32 to vector<32x128xf32>
    %134 = vector.shape_cast %128 : vector<32x1xf32> to vector<32x1xf32>
    %135 = vector.broadcast %134 : vector<32x1xf32> to vector<32x128xf32>
    %136 = arith.select %111, %133, %135 : vector<32x128xi1>, vector<32x128xf32>
    %137 = arith.mulf %90, %132 : vector<32x128xf32>
    %138 = arith.mulf %93, %136 : vector<32x128xf32>
    %139 = arith.subf %137, %138 : vector<32x128xf32>
    %140 = arith.mulf %90, %136 : vector<32x128xf32>
    %141 = arith.mulf %93, %132 : vector<32x128xf32>
    %142 = arith.addf %140, %141 : vector<32x128xf32>
    %c2_i32_40 = arith.constant 2 : i32
    %143 = vector.broadcast %c2_i32_40 : i32 to vector<1x128xi32>
    %144 = arith.shrsi %0, %143 : vector<1x128xi32>
    %c1_i32_41 = arith.constant 1 : i32
    %145 = vector.broadcast %c1_i32_41 : i32 to vector<1x128xi32>
    %146 = arith.andi %144, %145 : vector<1x128xi32>
    %c0_i32_42 = arith.constant 0 : i32
    %147 = vector.broadcast %c0_i32_42 : i32 to vector<1x128xi32>
    %148 = arith.cmpi ne, %146, %147 : vector<1x128xi32>
    %c1_i32_43 = arith.constant 1 : i32
    %149 = vector.broadcast %c1_i32_43 : i32 to vector<32x1xi32>
    %150 = arith.shrsi %1, %149 : vector<32x1xi32>
    %c1_i32_44 = arith.constant 1 : i32
    %151 = vector.broadcast %c1_i32_44 : i32 to vector<32x1xi32>
    %152 = arith.andi %150, %151 : vector<32x1xi32>
    %c0_i32_45 = arith.constant 0 : i32
    %153 = vector.broadcast %c0_i32_45 : i32 to vector<32x1xi32>
    %154 = arith.cmpi ne, %152, %153 : vector<32x1xi32>
    %155 = vector.broadcast %154 : vector<32x1xi1> to vector<32x128xi1>
    %156 = vector.broadcast %148 : vector<1x128xi1> to vector<32x128xi1>
    %157 = vector.broadcast %155 : vector<32x128xi1> to vector<32x128xi1>
    %158 = vector.broadcast %156 : vector<32x128xi1> to vector<32x128xi1>
    %159 = arith.xori %157, %158 : vector<32x128xi1>
    %cst_46 = arith.constant dense<true> : vector<32x128xi1>
    %160 = arith.xori %159, %cst_46 : vector<32x128xi1>
    %161 = arith.index_cast %arg0 : i32 to index
    %c3_47 = arith.constant 3 : index
    %c0_48 = arith.constant 0 : index
    %162 = memref.load %arg1[%161, %c3_47, %c0_48] : memref<1x6x4xf32, #tpu.memory_space<smem>>
    %163 = arith.index_cast %arg0 : i32 to index
    %c3_49 = arith.constant 3 : index
    %c1_50 = arith.constant 1 : index
    %164 = memref.load %arg1[%163, %c3_49, %c1_50] : memref<1x6x4xf32, #tpu.memory_space<smem>>
    %165 = arith.index_cast %arg0 : i32 to index
    %c3_51 = arith.constant 3 : index
    %c2_52 = arith.constant 2 : index
    %166 = memref.load %arg1[%165, %c3_51, %c2_52] : memref<1x6x4xf32, #tpu.memory_space<smem>>
    %167 = arith.index_cast %arg0 : i32 to index
    %c3_53 = arith.constant 3 : index
    %c3_54 = arith.constant 3 : index
    %168 = memref.load %arg1[%167, %c3_53, %c3_54] : memref<1x6x4xf32, #tpu.memory_space<smem>>
    %169 = arith.addf %162, %168 : f32
    %170 = arith.subf %162, %168 : f32
    %cst_55 = arith.constant 0.000000e+00 : f32
    %171 = arith.subf %cst_55, %166 : f32
    %172 = vector.broadcast %170 : f32 to vector<32x1xf32>
    %173 = vector.broadcast %169 : f32 to vector<32x1xf32>
    %174 = arith.select %154, %172, %173 : vector<32x1xi1>, vector<32x1xf32>
    %175 = vector.broadcast %166 : f32 to vector<32x1xf32>
    %176 = vector.broadcast %171 : f32 to vector<32x1xf32>
    %177 = arith.select %154, %175, %176 : vector<32x1xi1>, vector<32x1xf32>
    %178 = vector.shape_cast %174 : vector<32x1xf32> to vector<32x1xf32>
    %179 = vector.broadcast %178 : vector<32x1xf32> to vector<32x128xf32>
    %180 = vector.broadcast %164 : f32 to vector<32x128xf32>
    %181 = arith.select %160, %179, %180 : vector<32x128xi1>, vector<32x128xf32>
    %cst_56 = arith.constant 0.000000e+00 : f32
    %182 = vector.broadcast %cst_56 : f32 to vector<32x128xf32>
    %183 = vector.shape_cast %177 : vector<32x1xf32> to vector<32x1xf32>
    %184 = vector.broadcast %183 : vector<32x1xf32> to vector<32x128xf32>
    %185 = arith.select %160, %182, %184 : vector<32x128xi1>, vector<32x128xf32>
    %186 = arith.mulf %139, %181 : vector<32x128xf32>
    %187 = arith.mulf %142, %185 : vector<32x128xf32>
    %188 = arith.subf %186, %187 : vector<32x128xf32>
    %189 = arith.mulf %139, %185 : vector<32x128xf32>
    %190 = arith.mulf %142, %181 : vector<32x128xf32>
    %191 = arith.addf %189, %190 : vector<32x128xf32>
    %c1_i32_57 = arith.constant 1 : i32
    %192 = vector.broadcast %c1_i32_57 : i32 to vector<1x128xi32>
    %193 = arith.shrsi %0, %192 : vector<1x128xi32>
    %c1_i32_58 = arith.constant 1 : i32
    %194 = vector.broadcast %c1_i32_58 : i32 to vector<1x128xi32>
    %195 = arith.andi %193, %194 : vector<1x128xi32>
    %c0_i32_59 = arith.constant 0 : i32
    %196 = vector.broadcast %c0_i32_59 : i32 to vector<1x128xi32>
    %197 = arith.cmpi ne, %195, %196 : vector<1x128xi32>
    %c0_i32_60 = arith.constant 0 : i32
    %198 = vector.broadcast %c0_i32_60 : i32 to vector<32x1xi32>
    %199 = arith.shrsi %1, %198 : vector<32x1xi32>
    %c1_i32_61 = arith.constant 1 : i32
    %200 = vector.broadcast %c1_i32_61 : i32 to vector<32x1xi32>
    %201 = arith.andi %199, %200 : vector<32x1xi32>
    %c0_i32_62 = arith.constant 0 : i32
    %202 = vector.broadcast %c0_i32_62 : i32 to vector<32x1xi32>
    %203 = arith.cmpi ne, %201, %202 : vector<32x1xi32>
    %204 = vector.broadcast %203 : vector<32x1xi1> to vector<32x128xi1>
    %205 = vector.broadcast %197 : vector<1x128xi1> to vector<32x128xi1>
    %206 = vector.broadcast %204 : vector<32x128xi1> to vector<32x128xi1>
    %207 = vector.broadcast %205 : vector<32x128xi1> to vector<32x128xi1>
    %208 = arith.xori %206, %207 : vector<32x128xi1>
    %cst_63 = arith.constant dense<true> : vector<32x128xi1>
    %209 = arith.xori %208, %cst_63 : vector<32x128xi1>
    %210 = arith.index_cast %arg0 : i32 to index
    %c4 = arith.constant 4 : index
    %c0_64 = arith.constant 0 : index
    %211 = memref.load %arg1[%210, %c4, %c0_64] : memref<1x6x4xf32, #tpu.memory_space<smem>>
    %212 = arith.index_cast %arg0 : i32 to index
    %c4_65 = arith.constant 4 : index
    %c1_66 = arith.constant 1 : index
    %213 = memref.load %arg1[%212, %c4_65, %c1_66] : memref<1x6x4xf32, #tpu.memory_space<smem>>
    %214 = arith.index_cast %arg0 : i32 to index
    %c4_67 = arith.constant 4 : index
    %c2_68 = arith.constant 2 : index
    %215 = memref.load %arg1[%214, %c4_67, %c2_68] : memref<1x6x4xf32, #tpu.memory_space<smem>>
    %216 = arith.index_cast %arg0 : i32 to index
    %c4_69 = arith.constant 4 : index
    %c3_70 = arith.constant 3 : index
    %217 = memref.load %arg1[%216, %c4_69, %c3_70] : memref<1x6x4xf32, #tpu.memory_space<smem>>
    %218 = arith.addf %211, %217 : f32
    %219 = arith.subf %211, %217 : f32
    %cst_71 = arith.constant 0.000000e+00 : f32
    %220 = arith.subf %cst_71, %215 : f32
    %221 = vector.broadcast %219 : f32 to vector<32x1xf32>
    %222 = vector.broadcast %218 : f32 to vector<32x1xf32>
    %223 = arith.select %203, %221, %222 : vector<32x1xi1>, vector<32x1xf32>
    %224 = vector.broadcast %215 : f32 to vector<32x1xf32>
    %225 = vector.broadcast %220 : f32 to vector<32x1xf32>
    %226 = arith.select %203, %224, %225 : vector<32x1xi1>, vector<32x1xf32>
    %227 = vector.shape_cast %223 : vector<32x1xf32> to vector<32x1xf32>
    %228 = vector.broadcast %227 : vector<32x1xf32> to vector<32x128xf32>
    %229 = vector.broadcast %213 : f32 to vector<32x128xf32>
    %230 = arith.select %209, %228, %229 : vector<32x128xi1>, vector<32x128xf32>
    %cst_72 = arith.constant 0.000000e+00 : f32
    %231 = vector.broadcast %cst_72 : f32 to vector<32x128xf32>
    %232 = vector.shape_cast %226 : vector<32x1xf32> to vector<32x1xf32>
    %233 = vector.broadcast %232 : vector<32x1xf32> to vector<32x128xf32>
    %234 = arith.select %209, %231, %233 : vector<32x128xi1>, vector<32x128xf32>
    %235 = arith.mulf %188, %230 : vector<32x128xf32>
    %236 = arith.mulf %191, %234 : vector<32x128xf32>
    %237 = arith.subf %235, %236 : vector<32x128xf32>
    %238 = arith.mulf %188, %234 : vector<32x128xf32>
    %239 = arith.mulf %191, %230 : vector<32x128xf32>
    %240 = arith.addf %238, %239 : vector<32x128xf32>
    %c0_i32_73 = arith.constant 0 : i32
    %241 = vector.broadcast %c0_i32_73 : i32 to vector<1x128xi32>
    %242 = arith.shrsi %0, %241 : vector<1x128xi32>
    %c1_i32_74 = arith.constant 1 : i32
    %243 = vector.broadcast %c1_i32_74 : i32 to vector<1x128xi32>
    %244 = arith.andi %242, %243 : vector<1x128xi32>
    %c0_i32_75 = arith.constant 0 : i32
    %245 = vector.broadcast %c0_i32_75 : i32 to vector<1x128xi32>
    %246 = arith.cmpi ne, %244, %245 : vector<1x128xi32>
    %c6_i32 = arith.constant 6 : i32
    %247 = vector.broadcast %c6_i32 : i32 to vector<1x128xi32>
    %248 = arith.shrsi %0, %247 : vector<1x128xi32>
    %c1_i32_76 = arith.constant 1 : i32
    %249 = vector.broadcast %c1_i32_76 : i32 to vector<1x128xi32>
    %250 = arith.andi %248, %249 : vector<1x128xi32>
    %c0_i32_77 = arith.constant 0 : i32
    %251 = vector.broadcast %c0_i32_77 : i32 to vector<1x128xi32>
    %252 = arith.cmpi ne, %250, %251 : vector<1x128xi32>
    %253 = arith.xori %252, %246 : vector<1x128xi1>
    %cst_78 = arith.constant dense<true> : vector<1x128xi1>
    %254 = arith.xori %253, %cst_78 : vector<1x128xi1>
    %255 = arith.index_cast %arg0 : i32 to index
    %c5 = arith.constant 5 : index
    %c0_79 = arith.constant 0 : index
    %256 = memref.load %arg1[%255, %c5, %c0_79] : memref<1x6x4xf32, #tpu.memory_space<smem>>
    %257 = arith.index_cast %arg0 : i32 to index
    %c5_80 = arith.constant 5 : index
    %c1_81 = arith.constant 1 : index
    %258 = memref.load %arg1[%257, %c5_80, %c1_81] : memref<1x6x4xf32, #tpu.memory_space<smem>>
    %259 = arith.index_cast %arg0 : i32 to index
    %c5_82 = arith.constant 5 : index
    %c2_83 = arith.constant 2 : index
    %260 = memref.load %arg1[%259, %c5_82, %c2_83] : memref<1x6x4xf32, #tpu.memory_space<smem>>
    %261 = arith.index_cast %arg0 : i32 to index
    %c5_84 = arith.constant 5 : index
    %c3_85 = arith.constant 3 : index
    %262 = memref.load %arg1[%261, %c5_84, %c3_85] : memref<1x6x4xf32, #tpu.memory_space<smem>>
    %263 = arith.addf %256, %262 : f32
    %264 = arith.subf %256, %262 : f32
    %cst_86 = arith.constant 0.000000e+00 : f32
    %265 = arith.subf %cst_86, %260 : f32
    %266 = vector.broadcast %264 : f32 to vector<1x128xf32>
    %267 = vector.broadcast %263 : f32 to vector<1x128xf32>
    %268 = arith.select %252, %266, %267 : vector<1x128xi1>, vector<1x128xf32>
    %269 = vector.broadcast %260 : f32 to vector<1x128xf32>
    %270 = vector.broadcast %265 : f32 to vector<1x128xf32>
    %271 = arith.select %252, %269, %270 : vector<1x128xi1>, vector<1x128xf32>
    %272 = vector.broadcast %258 : f32 to vector<1x128xf32>
    %273 = arith.select %254, %268, %272 : vector<1x128xi1>, vector<1x128xf32>
    %cst_87 = arith.constant 0.000000e+00 : f32
    %274 = vector.broadcast %cst_87 : f32 to vector<1x128xf32>
    %275 = arith.select %254, %274, %271 : vector<1x128xi1>, vector<1x128xf32>
    %276 = vector.broadcast %273 : vector<1x128xf32> to vector<32x128xf32>
    %277 = arith.mulf %237, %276 : vector<32x128xf32>
    %278 = vector.broadcast %275 : vector<1x128xf32> to vector<32x128xf32>
    %279 = arith.mulf %240, %278 : vector<32x128xf32>
    %280 = arith.subf %277, %279 : vector<32x128xf32>
    %281 = vector.broadcast %275 : vector<1x128xf32> to vector<32x128xf32>
    %282 = arith.mulf %237, %281 : vector<32x128xf32>
    %283 = vector.broadcast %273 : vector<1x128xf32> to vector<32x128xf32>
    %284 = arith.mulf %240, %283 : vector<32x128xf32>
    %285 = arith.addf %282, %284 : vector<32x128xf32>
    %c0_88 = arith.constant 0 : index
    %c0_89 = arith.constant 0 : index
    %c0_90 = arith.constant 0 : index
    %286 = vector.load %arg3[%c0_88, %c0_89, %c0_90] : memref<1x32x128xf32, #tpu.memory_space<vmem>>, vector<1x32x128xf32>
    %287 = vector.shape_cast %286 : vector<1x32x128xf32> to vector<32x128xf32>
    %288 = vector.shape_cast %280 : vector<32x128xf32> to vector<1x32x128xf32>
    tpu.vector_store %arg3[%c0_88, %c0_89, %c0_90], %288 {strides = array<i32>} : memref<1x32x128xf32, #tpu.memory_space<vmem>>, vector<1x32x128xf32>,
    %c0_91 = arith.constant 0 : index
    %c0_92 = arith.constant 0 : index
    %c0_93 = arith.constant 0 : index
    %289 = vector.load %arg4[%c0_91, %c0_92, %c0_93] : memref<1x32x128xf32, #tpu.memory_space<vmem>>, vector<1x32x128xf32>
    %290 = vector.shape_cast %289 : vector<1x32x128xf32> to vector<32x128xf32>
    %291 = vector.shape_cast %285 : vector<32x128xf32> to vector<1x32x128xf32>
    tpu.vector_store %arg4[%c0_91, %c0_92, %c0_93], %291 {strides = array<i32>} : memref<1x32x128xf32, #tpu.memory_space<vmem>>, vector<1x32x128xf32>,
    %c5_i32_94 = arith.constant 5 : i32
    %292 = vector.broadcast %c5_i32_94 : i32 to vector<1x128xi32>
    %293 = arith.shrsi %0, %292 : vector<1x128xi32>
    %c1_i32_95 = arith.constant 1 : i32
    %294 = vector.broadcast %c1_i32_95 : i32 to vector<1x128xi32>
    %295 = arith.andi %293, %294 : vector<1x128xi32>
    %c0_i32_96 = arith.constant 0 : i32
    %296 = vector.broadcast %c0_i32_96 : i32 to vector<1x128xi32>
    %297 = arith.cmpi ne, %295, %296 : vector<1x128xi32>
    %c4_i32_97 = arith.constant 4 : i32
    %298 = vector.broadcast %c4_i32_97 : i32 to vector<32x1xi32>
    %299 = arith.shrsi %1, %298 : vector<32x1xi32>
    %c1_i32_98 = arith.constant 1 : i32
    %300 = vector.broadcast %c1_i32_98 : i32 to vector<32x1xi32>
    %301 = arith.andi %299, %300 : vector<32x1xi32>
    %c0_i32_99 = arith.constant 0 : i32
    %302 = vector.broadcast %c0_i32_99 : i32 to vector<32x1xi32>
    %303 = arith.cmpi ne, %301, %302 : vector<32x1xi32>
    %304 = vector.broadcast %303 : vector<32x1xi1> to vector<32x128xi1>
    %305 = vector.broadcast %297 : vector<1x128xi1> to vector<32x128xi1>
    %306 = vector.broadcast %304 : vector<32x128xi1> to vector<32x128xi1>
    %307 = vector.broadcast %305 : vector<32x128xi1> to vector<32x128xi1>
    %308 = arith.xori %306, %307 : vector<32x128xi1>
    %cst_100 = arith.constant dense<true> : vector<32x128xi1>
    %309 = arith.xori %308, %cst_100 : vector<32x128xi1>
    %310 = arith.index_cast %arg0 : i32 to index
    %c0_101 = arith.constant 0 : index
    %c0_102 = arith.constant 0 : index
    %311 = memref.load %arg2[%310, %c0_101, %c0_102] : memref<1x6x4xf32, #tpu.memory_space<smem>>
    %312 = arith.index_cast %arg0 : i32 to index
    %c0_103 = arith.constant 0 : index
    %c1_104 = arith.constant 1 : index
    %313 = memref.load %arg2[%312, %c0_103, %c1_104] : memref<1x6x4xf32, #tpu.memory_space<smem>>
    %314 = arith.index_cast %arg0 : i32 to index
    %c0_105 = arith.constant 0 : index
    %c2_106 = arith.constant 2 : index
    %315 = memref.load %arg2[%314, %c0_105, %c2_106] : memref<1x6x4xf32, #tpu.memory_space<smem>>
    %316 = arith.index_cast %arg0 : i32 to index
    %c0_107 = arith.constant 0 : index
    %c3_108 = arith.constant 3 : index
    %317 = memref.load %arg2[%316, %c0_107, %c3_108] : memref<1x6x4xf32, #tpu.memory_space<smem>>
    %318 = arith.addf %311, %317 : f32
    %319 = arith.subf %311, %317 : f32
    %cst_109 = arith.constant 0.000000e+00 : f32
    %320 = arith.subf %cst_109, %315 : f32
    %321 = vector.broadcast %319 : f32 to vector<32x1xf32>
    %322 = vector.broadcast %318 : f32 to vector<32x1xf32>
    %323 = arith.select %303, %321, %322 : vector<32x1xi1>, vector<32x1xf32>
    %324 = vector.broadcast %315 : f32 to vector<32x1xf32>
    %325 = vector.broadcast %320 : f32 to vector<32x1xf32>
    %326 = arith.select %303, %324, %325 : vector<32x1xi1>, vector<32x1xf32>
    %327 = vector.shape_cast %323 : vector<32x1xf32> to vector<32x1xf32>
    %328 = vector.broadcast %327 : vector<32x1xf32> to vector<32x128xf32>
    %329 = vector.broadcast %313 : f32 to vector<32x128xf32>
    %330 = arith.select %309, %328, %329 : vector<32x128xi1>, vector<32x128xf32>
    %cst_110 = arith.constant 0.000000e+00 : f32
    %331 = vector.broadcast %cst_110 : f32 to vector<32x128xf32>
    %332 = vector.shape_cast %326 : vector<32x1xf32> to vector<32x1xf32>
    %333 = vector.broadcast %332 : vector<32x1xf32> to vector<32x128xf32>
    %334 = arith.select %309, %331, %333 : vector<32x128xi1>, vector<32x128xf32>
    %c4_i32_111 = arith.constant 4 : i32
    %335 = vector.broadcast %c4_i32_111 : i32 to vector<1x128xi32>
    %336 = arith.shrsi %0, %335 : vector<1x128xi32>
    %c1_i32_112 = arith.constant 1 : i32
    %337 = vector.broadcast %c1_i32_112 : i32 to vector<1x128xi32>
    %338 = arith.andi %336, %337 : vector<1x128xi32>
    %c0_i32_113 = arith.constant 0 : i32
    %339 = vector.broadcast %c0_i32_113 : i32 to vector<1x128xi32>
    %340 = arith.cmpi ne, %338, %339 : vector<1x128xi32>
    %c3_i32_114 = arith.constant 3 : i32
    %341 = vector.broadcast %c3_i32_114 : i32 to vector<32x1xi32>
    %342 = arith.shrsi %1, %341 : vector<32x1xi32>
    %c1_i32_115 = arith.constant 1 : i32
    %343 = vector.broadcast %c1_i32_115 : i32 to vector<32x1xi32>
    %344 = arith.andi %342, %343 : vector<32x1xi32>
    %c0_i32_116 = arith.constant 0 : i32
    %345 = vector.broadcast %c0_i32_116 : i32 to vector<32x1xi32>
    %346 = arith.cmpi ne, %344, %345 : vector<32x1xi32>
    %347 = vector.broadcast %346 : vector<32x1xi1> to vector<32x128xi1>
    %348 = vector.broadcast %340 : vector<1x128xi1> to vector<32x128xi1>
    %349 = vector.broadcast %347 : vector<32x128xi1> to vector<32x128xi1>
    %350 = vector.broadcast %348 : vector<32x128xi1> to vector<32x128xi1>
    %351 = arith.xori %349, %350 : vector<32x128xi1>
    %cst_117 = arith.constant dense<true> : vector<32x128xi1>
    %352 = arith.xori %351, %cst_117 : vector<32x128xi1>
    %353 = arith.index_cast %arg0 : i32 to index
    %c1_118 = arith.constant 1 : index
    %c0_119 = arith.constant 0 : index
    %354 = memref.load %arg2[%353, %c1_118, %c0_119] : memref<1x6x4xf32, #tpu.memory_space<smem>>
    %355 = arith.index_cast %arg0 : i32 to index
    %c1_120 = arith.constant 1 : index
    %c1_121 = arith.constant 1 : index
    %356 = memref.load %arg2[%355, %c1_120, %c1_121] : memref<1x6x4xf32, #tpu.memory_space<smem>>
    %357 = arith.index_cast %arg0 : i32 to index
    %c1_122 = arith.constant 1 : index
    %c2_123 = arith.constant 2 : index
    %358 = memref.load %arg2[%357, %c1_122, %c2_123] : memref<1x6x4xf32, #tpu.memory_space<smem>>
    %359 = arith.index_cast %arg0 : i32 to index
    %c1_124 = arith.constant 1 : index
    %c3_125 = arith.constant 3 : index
    %360 = memref.load %arg2[%359, %c1_124, %c3_125] : memref<1x6x4xf32, #tpu.memory_space<smem>>
    %361 = arith.addf %354, %360 : f32
    %362 = arith.subf %354, %360 : f32
    %cst_126 = arith.constant 0.000000e+00 : f32
    %363 = arith.subf %cst_126, %358 : f32
    %364 = vector.broadcast %362 : f32 to vector<32x1xf32>
    %365 = vector.broadcast %361 : f32 to vector<32x1xf32>
    %366 = arith.select %346, %364, %365 : vector<32x1xi1>, vector<32x1xf32>
    %367 = vector.broadcast %358 : f32 to vector<32x1xf32>
    %368 = vector.broadcast %363 : f32 to vector<32x1xf32>
    %369 = arith.select %346, %367, %368 : vector<32x1xi1>, vector<32x1xf32>
    %370 = vector.shape_cast %366 : vector<32x1xf32> to vector<32x1xf32>
    %371 = vector.broadcast %370 : vector<32x1xf32> to vector<32x128xf32>
    %372 = vector.broadcast %356 : f32 to vector<32x128xf32>
    %373 = arith.select %352, %371, %372 : vector<32x128xi1>, vector<32x128xf32>
    %cst_127 = arith.constant 0.000000e+00 : f32
    %374 = vector.broadcast %cst_127 : f32 to vector<32x128xf32>
    %375 = vector.shape_cast %369 : vector<32x1xf32> to vector<32x1xf32>
    %376 = vector.broadcast %375 : vector<32x1xf32> to vector<32x128xf32>
    %377 = arith.select %352, %374, %376 : vector<32x128xi1>, vector<32x128xf32>
    %378 = arith.mulf %330, %373 : vector<32x128xf32>
    %379 = arith.mulf %334, %377 : vector<32x128xf32>
    %380 = arith.subf %378, %379 : vector<32x128xf32>
    %381 = arith.mulf %330, %377 : vector<32x128xf32>
    %382 = arith.mulf %334, %373 : vector<32x128xf32>
    %383 = arith.addf %381, %382 : vector<32x128xf32>
    %c3_i32_128 = arith.constant 3 : i32
    %384 = vector.broadcast %c3_i32_128 : i32 to vector<1x128xi32>
    %385 = arith.shrsi %0, %384 : vector<1x128xi32>
    %c1_i32_129 = arith.constant 1 : i32
    %386 = vector.broadcast %c1_i32_129 : i32 to vector<1x128xi32>
    %387 = arith.andi %385, %386 : vector<1x128xi32>
    %c0_i32_130 = arith.constant 0 : i32
    %388 = vector.broadcast %c0_i32_130 : i32 to vector<1x128xi32>
    %389 = arith.cmpi ne, %387, %388 : vector<1x128xi32>
    %c2_i32_131 = arith.constant 2 : i32
    %390 = vector.broadcast %c2_i32_131 : i32 to vector<32x1xi32>
    %391 = arith.shrsi %1, %390 : vector<32x1xi32>
    %c1_i32_132 = arith.constant 1 : i32
    %392 = vector.broadcast %c1_i32_132 : i32 to vector<32x1xi32>
    %393 = arith.andi %391, %392 : vector<32x1xi32>
    %c0_i32_133 = arith.constant 0 : i32
    %394 = vector.broadcast %c0_i32_133 : i32 to vector<32x1xi32>
    %395 = arith.cmpi ne, %393, %394 : vector<32x1xi32>
    %396 = vector.broadcast %395 : vector<32x1xi1> to vector<32x128xi1>
    %397 = vector.broadcast %389 : vector<1x128xi1> to vector<32x128xi1>
    %398 = vector.broadcast %396 : vector<32x128xi1> to vector<32x128xi1>
    %399 = vector.broadcast %397 : vector<32x128xi1> to vector<32x128xi1>
    %400 = arith.xori %398, %399 : vector<32x128xi1>
    %cst_134 = arith.constant dense<true> : vector<32x128xi1>
    %401 = arith.xori %400, %cst_134 : vector<32x128xi1>
    %402 = arith.index_cast %arg0 : i32 to index
    %c2_135 = arith.constant 2 : index
    %c0_136 = arith.constant 0 : index
    %403 = memref.load %arg2[%402, %c2_135, %c0_136] : memref<1x6x4xf32, #tpu.memory_space<smem>>
    %404 = arith.index_cast %arg0 : i32 to index
    %c2_137 = arith.constant 2 : index
    %c1_138 = arith.constant 1 : index
    %405 = memref.load %arg2[%404, %c2_137, %c1_138] : memref<1x6x4xf32, #tpu.memory_space<smem>>
    %406 = arith.index_cast %arg0 : i32 to index
    %c2_139 = arith.constant 2 : index
    %c2_140 = arith.constant 2 : index
    %407 = memref.load %arg2[%406, %c2_139, %c2_140] : memref<1x6x4xf32, #tpu.memory_space<smem>>
    %408 = arith.index_cast %arg0 : i32 to index
    %c2_141 = arith.constant 2 : index
    %c3_142 = arith.constant 3 : index
    %409 = memref.load %arg2[%408, %c2_141, %c3_142] : memref<1x6x4xf32, #tpu.memory_space<smem>>
    %410 = arith.addf %403, %409 : f32
    %411 = arith.subf %403, %409 : f32
    %cst_143 = arith.constant 0.000000e+00 : f32
    %412 = arith.subf %cst_143, %407 : f32
    %413 = vector.broadcast %411 : f32 to vector<32x1xf32>
    %414 = vector.broadcast %410 : f32 to vector<32x1xf32>
    %415 = arith.select %395, %413, %414 : vector<32x1xi1>, vector<32x1xf32>
    %416 = vector.broadcast %407 : f32 to vector<32x1xf32>
    %417 = vector.broadcast %412 : f32 to vector<32x1xf32>
    %418 = arith.select %395, %416, %417 : vector<32x1xi1>, vector<32x1xf32>
    %419 = vector.shape_cast %415 : vector<32x1xf32> to vector<32x1xf32>
    %420 = vector.broadcast %419 : vector<32x1xf32> to vector<32x128xf32>
    %421 = vector.broadcast %405 : f32 to vector<32x128xf32>
    %422 = arith.select %401, %420, %421 : vector<32x128xi1>, vector<32x128xf32>
    %cst_144 = arith.constant 0.000000e+00 : f32
    %423 = vector.broadcast %cst_144 : f32 to vector<32x128xf32>
    %424 = vector.shape_cast %418 : vector<32x1xf32> to vector<32x1xf32>
    %425 = vector.broadcast %424 : vector<32x1xf32> to vector<32x128xf32>
    %426 = arith.select %401, %423, %425 : vector<32x128xi1>, vector<32x128xf32>
    %427 = arith.mulf %380, %422 : vector<32x128xf32>
    %428 = arith.mulf %383, %426 : vector<32x128xf32>
    %429 = arith.subf %427, %428 : vector<32x128xf32>
    %430 = arith.mulf %380, %426 : vector<32x128xf32>
    %431 = arith.mulf %383, %422 : vector<32x128xf32>
    %432 = arith.addf %430, %431 : vector<32x128xf32>
    %c2_i32_145 = arith.constant 2 : i32
    %433 = vector.broadcast %c2_i32_145 : i32 to vector<1x128xi32>
    %434 = arith.shrsi %0, %433 : vector<1x128xi32>
    %c1_i32_146 = arith.constant 1 : i32
    %435 = vector.broadcast %c1_i32_146 : i32 to vector<1x128xi32>
    %436 = arith.andi %434, %435 : vector<1x128xi32>
    %c0_i32_147 = arith.constant 0 : i32
    %437 = vector.broadcast %c0_i32_147 : i32 to vector<1x128xi32>
    %438 = arith.cmpi ne, %436, %437 : vector<1x128xi32>
    %c1_i32_148 = arith.constant 1 : i32
    %439 = vector.broadcast %c1_i32_148 : i32 to vector<32x1xi32>
    %440 = arith.shrsi %1, %439 : vector<32x1xi32>
    %c1_i32_149 = arith.constant 1 : i32
    %441 = vector.broadcast %c1_i32_149 : i32 to vector<32x1xi32>
    %442 = arith.andi %440, %441 : vector<32x1xi32>
    %c0_i32_150 = arith.constant 0 : i32
    %443 = vector.broadcast %c0_i32_150 : i32 to vector<32x1xi32>
    %444 = arith.cmpi ne, %442, %443 : vector<32x1xi32>
    %445 = vector.broadcast %444 : vector<32x1xi1> to vector<32x128xi1>
    %446 = vector.broadcast %438 : vector<1x128xi1> to vector<32x128xi1>
    %447 = vector.broadcast %445 : vector<32x128xi1> to vector<32x128xi1>
    %448 = vector.broadcast %446 : vector<32x128xi1> to vector<32x128xi1>
    %449 = arith.xori %447, %448 : vector<32x128xi1>
    %cst_151 = arith.constant dense<true> : vector<32x128xi1>
    %450 = arith.xori %449, %cst_151 : vector<32x128xi1>
    %451 = arith.index_cast %arg0 : i32 to index
    %c3_152 = arith.constant 3 : index
    %c0_153 = arith.constant 0 : index
    %452 = memref.load %arg2[%451, %c3_152, %c0_153] : memref<1x6x4xf32, #tpu.memory_space<smem>>
    %453 = arith.index_cast %arg0 : i32 to index
    %c3_154 = arith.constant 3 : index
    %c1_155 = arith.constant 1 : index
    %454 = memref.load %arg2[%453, %c3_154, %c1_155] : memref<1x6x4xf32, #tpu.memory_space<smem>>
    %455 = arith.index_cast %arg0 : i32 to index
    %c3_156 = arith.constant 3 : index
    %c2_157 = arith.constant 2 : index
    %456 = memref.load %arg2[%455, %c3_156, %c2_157] : memref<1x6x4xf32, #tpu.memory_space<smem>>
    %457 = arith.index_cast %arg0 : i32 to index
    %c3_158 = arith.constant 3 : index
    %c3_159 = arith.constant 3 : index
    %458 = memref.load %arg2[%457, %c3_158, %c3_159] : memref<1x6x4xf32, #tpu.memory_space<smem>>
    %459 = arith.addf %452, %458 : f32
    %460 = arith.subf %452, %458 : f32
    %cst_160 = arith.constant 0.000000e+00 : f32
    %461 = arith.subf %cst_160, %456 : f32
    %462 = vector.broadcast %460 : f32 to vector<32x1xf32>
    %463 = vector.broadcast %459 : f32 to vector<32x1xf32>
    %464 = arith.select %444, %462, %463 : vector<32x1xi1>, vector<32x1xf32>
    %465 = vector.broadcast %456 : f32 to vector<32x1xf32>
    %466 = vector.broadcast %461 : f32 to vector<32x1xf32>
    %467 = arith.select %444, %465, %466 : vector<32x1xi1>, vector<32x1xf32>
    %468 = vector.shape_cast %464 : vector<32x1xf32> to vector<32x1xf32>
    %469 = vector.broadcast %468 : vector<32x1xf32> to vector<32x128xf32>
    %470 = vector.broadcast %454 : f32 to vector<32x128xf32>
    %471 = arith.select %450, %469, %470 : vector<32x128xi1>, vector<32x128xf32>
    %cst_161 = arith.constant 0.000000e+00 : f32
    %472 = vector.broadcast %cst_161 : f32 to vector<32x128xf32>
    %473 = vector.shape_cast %467 : vector<32x1xf32> to vector<32x1xf32>
    %474 = vector.broadcast %473 : vector<32x1xf32> to vector<32x128xf32>
    %475 = arith.select %450, %472, %474 : vector<32x128xi1>, vector<32x128xf32>
    %476 = arith.mulf %429, %471 : vector<32x128xf32>
    %477 = arith.mulf %432, %475 : vector<32x128xf32>
    %478 = arith.subf %476, %477 : vector<32x128xf32>
    %479 = arith.mulf %429, %475 : vector<32x128xf32>
    %480 = arith.mulf %432, %471 : vector<32x128xf32>
    %481 = arith.addf %479, %480 : vector<32x128xf32>
    %c1_i32_162 = arith.constant 1 : i32
    %482 = vector.broadcast %c1_i32_162 : i32 to vector<1x128xi32>
    %483 = arith.shrsi %0, %482 : vector<1x128xi32>
    %c1_i32_163 = arith.constant 1 : i32
    %484 = vector.broadcast %c1_i32_163 : i32 to vector<1x128xi32>
    %485 = arith.andi %483, %484 : vector<1x128xi32>
    %c0_i32_164 = arith.constant 0 : i32
    %486 = vector.broadcast %c0_i32_164 : i32 to vector<1x128xi32>
    %487 = arith.cmpi ne, %485, %486 : vector<1x128xi32>
    %c0_i32_165 = arith.constant 0 : i32
    %488 = vector.broadcast %c0_i32_165 : i32 to vector<32x1xi32>
    %489 = arith.shrsi %1, %488 : vector<32x1xi32>
    %c1_i32_166 = arith.constant 1 : i32
    %490 = vector.broadcast %c1_i32_166 : i32 to vector<32x1xi32>
    %491 = arith.andi %489, %490 : vector<32x1xi32>
    %c0_i32_167 = arith.constant 0 : i32
    %492 = vector.broadcast %c0_i32_167 : i32 to vector<32x1xi32>
    %493 = arith.cmpi ne, %491, %492 : vector<32x1xi32>
    %494 = vector.broadcast %493 : vector<32x1xi1> to vector<32x128xi1>
    %495 = vector.broadcast %487 : vector<1x128xi1> to vector<32x128xi1>
    %496 = vector.broadcast %494 : vector<32x128xi1> to vector<32x128xi1>
    %497 = vector.broadcast %495 : vector<32x128xi1> to vector<32x128xi1>
    %498 = arith.xori %496, %497 : vector<32x128xi1>
    %cst_168 = arith.constant dense<true> : vector<32x128xi1>
    %499 = arith.xori %498, %cst_168 : vector<32x128xi1>
    %500 = arith.index_cast %arg0 : i32 to index
    %c4_169 = arith.constant 4 : index
    %c0_170 = arith.constant 0 : index
    %501 = memref.load %arg2[%500, %c4_169, %c0_170] : memref<1x6x4xf32, #tpu.memory_space<smem>>
    %502 = arith.index_cast %arg0 : i32 to index
    %c4_171 = arith.constant 4 : index
    %c1_172 = arith.constant 1 : index
    %503 = memref.load %arg2[%502, %c4_171, %c1_172] : memref<1x6x4xf32, #tpu.memory_space<smem>>
    %504 = arith.index_cast %arg0 : i32 to index
    %c4_173 = arith.constant 4 : index
    %c2_174 = arith.constant 2 : index
    %505 = memref.load %arg2[%504, %c4_173, %c2_174] : memref<1x6x4xf32, #tpu.memory_space<smem>>
    %506 = arith.index_cast %arg0 : i32 to index
    %c4_175 = arith.constant 4 : index
    %c3_176 = arith.constant 3 : index
    %507 = memref.load %arg2[%506, %c4_175, %c3_176] : memref<1x6x4xf32, #tpu.memory_space<smem>>
    %508 = arith.addf %501, %507 : f32
    %509 = arith.subf %501, %507 : f32
    %cst_177 = arith.constant 0.000000e+00 : f32
    %510 = arith.subf %cst_177, %505 : f32
    %511 = vector.broadcast %509 : f32 to vector<32x1xf32>
    %512 = vector.broadcast %508 : f32 to vector<32x1xf32>
    %513 = arith.select %493, %511, %512 : vector<32x1xi1>, vector<32x1xf32>
    %514 = vector.broadcast %505 : f32 to vector<32x1xf32>
    %515 = vector.broadcast %510 : f32 to vector<32x1xf32>
    %516 = arith.select %493, %514, %515 : vector<32x1xi1>, vector<32x1xf32>
    %517 = vector.shape_cast %513 : vector<32x1xf32> to vector<32x1xf32>
    %518 = vector.broadcast %517 : vector<32x1xf32> to vector<32x128xf32>
    %519 = vector.broadcast %503 : f32 to vector<32x128xf32>
    %520 = arith.select %499, %518, %519 : vector<32x128xi1>, vector<32x128xf32>
    %cst_178 = arith.constant 0.000000e+00 : f32
    %521 = vector.broadcast %cst_178 : f32 to vector<32x128xf32>
    %522 = vector.shape_cast %516 : vector<32x1xf32> to vector<32x1xf32>
    %523 = vector.broadcast %522 : vector<32x1xf32> to vector<32x128xf32>
    %524 = arith.select %499, %521, %523 : vector<32x128xi1>, vector<32x128xf32>
    %525 = arith.mulf %478, %520 : vector<32x128xf32>
    %526 = arith.mulf %481, %524 : vector<32x128xf32>
    %527 = arith.subf %525, %526 : vector<32x128xf32>
    %528 = arith.mulf %478, %524 : vector<32x128xf32>
    %529 = arith.mulf %481, %520 : vector<32x128xf32>
    %530 = arith.addf %528, %529 : vector<32x128xf32>
    %c0_i32_179 = arith.constant 0 : i32
    %531 = vector.broadcast %c0_i32_179 : i32 to vector<1x128xi32>
    %532 = arith.shrsi %0, %531 : vector<1x128xi32>
    %c1_i32_180 = arith.constant 1 : i32
    %533 = vector.broadcast %c1_i32_180 : i32 to vector<1x128xi32>
    %534 = arith.andi %532, %533 : vector<1x128xi32>
    %c0_i32_181 = arith.constant 0 : i32
    %535 = vector.broadcast %c0_i32_181 : i32 to vector<1x128xi32>
    %536 = arith.cmpi ne, %534, %535 : vector<1x128xi32>
    %c6_i32_182 = arith.constant 6 : i32
    %537 = vector.broadcast %c6_i32_182 : i32 to vector<1x128xi32>
    %538 = arith.shrsi %0, %537 : vector<1x128xi32>
    %c1_i32_183 = arith.constant 1 : i32
    %539 = vector.broadcast %c1_i32_183 : i32 to vector<1x128xi32>
    %540 = arith.andi %538, %539 : vector<1x128xi32>
    %c0_i32_184 = arith.constant 0 : i32
    %541 = vector.broadcast %c0_i32_184 : i32 to vector<1x128xi32>
    %542 = arith.cmpi ne, %540, %541 : vector<1x128xi32>
    %543 = arith.xori %542, %536 : vector<1x128xi1>
    %cst_185 = arith.constant dense<true> : vector<1x128xi1>
    %544 = arith.xori %543, %cst_185 : vector<1x128xi1>
    %545 = arith.index_cast %arg0 : i32 to index
    %c5_186 = arith.constant 5 : index
    %c0_187 = arith.constant 0 : index
    %546 = memref.load %arg2[%545, %c5_186, %c0_187] : memref<1x6x4xf32, #tpu.memory_space<smem>>
    %547 = arith.index_cast %arg0 : i32 to index
    %c5_188 = arith.constant 5 : index
    %c1_189 = arith.constant 1 : index
    %548 = memref.load %arg2[%547, %c5_188, %c1_189] : memref<1x6x4xf32, #tpu.memory_space<smem>>
    %549 = arith.index_cast %arg0 : i32 to index
    %c5_190 = arith.constant 5 : index
    %c2_191 = arith.constant 2 : index
    %550 = memref.load %arg2[%549, %c5_190, %c2_191] : memref<1x6x4xf32, #tpu.memory_space<smem>>
    %551 = arith.index_cast %arg0 : i32 to index
    %c5_192 = arith.constant 5 : index
    %c3_193 = arith.constant 3 : index
    %552 = memref.load %arg2[%551, %c5_192, %c3_193] : memref<1x6x4xf32, #tpu.memory_space<smem>>
    %553 = arith.addf %546, %552 : f32
    %554 = arith.subf %546, %552 : f32
    %cst_194 = arith.constant 0.000000e+00 : f32
    %555 = arith.subf %cst_194, %550 : f32
    %556 = vector.broadcast %554 : f32 to vector<1x128xf32>
    %557 = vector.broadcast %553 : f32 to vector<1x128xf32>
    %558 = arith.select %542, %556, %557 : vector<1x128xi1>, vector<1x128xf32>
    %559 = vector.broadcast %550 : f32 to vector<1x128xf32>
    %560 = vector.broadcast %555 : f32 to vector<1x128xf32>
    %561 = arith.select %542, %559, %560 : vector<1x128xi1>, vector<1x128xf32>
    %562 = vector.broadcast %548 : f32 to vector<1x128xf32>
    %563 = arith.select %544, %558, %562 : vector<1x128xi1>, vector<1x128xf32>
    %cst_195 = arith.constant 0.000000e+00 : f32
    %564 = vector.broadcast %cst_195 : f32 to vector<1x128xf32>
    %565 = arith.select %544, %564, %561 : vector<1x128xi1>, vector<1x128xf32>
    %566 = vector.broadcast %563 : vector<1x128xf32> to vector<32x128xf32>
    %567 = arith.mulf %527, %566 : vector<32x128xf32>
    %568 = vector.broadcast %565 : vector<1x128xf32> to vector<32x128xf32>
    %569 = arith.mulf %530, %568 : vector<32x128xf32>
    %570 = arith.subf %567, %569 : vector<32x128xf32>
    %571 = vector.broadcast %565 : vector<1x128xf32> to vector<32x128xf32>
    %572 = arith.mulf %527, %571 : vector<32x128xf32>
    %573 = vector.broadcast %563 : vector<1x128xf32> to vector<32x128xf32>
    %574 = arith.mulf %530, %573 : vector<32x128xf32>
    %575 = arith.addf %572, %574 : vector<32x128xf32>
    %c0_196 = arith.constant 0 : index
    %c0_197 = arith.constant 0 : index
    %c0_198 = arith.constant 0 : index
    %576 = vector.load %arg5[%c0_196, %c0_197, %c0_198] : memref<1x32x128xf32, #tpu.memory_space<vmem>>, vector<1x32x128xf32>
    %577 = vector.shape_cast %576 : vector<1x32x128xf32> to vector<32x128xf32>
    %578 = vector.shape_cast %570 : vector<32x128xf32> to vector<1x32x128xf32>
    tpu.vector_store %arg5[%c0_196, %c0_197, %c0_198], %578 {strides = array<i32>} : memref<1x32x128xf32, #tpu.memory_space<vmem>>, vector<1x32x128xf32>,
    %c0_199 = arith.constant 0 : index
    %c0_200 = arith.constant 0 : index
    %c0_201 = arith.constant 0 : index
    %579 = vector.load %arg6[%c0_199, %c0_200, %c0_201] : memref<1x32x128xf32, #tpu.memory_space<vmem>>, vector<1x32x128xf32>
    %580 = vector.shape_cast %579 : vector<1x32x128xf32> to vector<32x128xf32>
    %581 = vector.shape_cast %575 : vector<32x128xf32> to vector<1x32x128xf32>
    tpu.vector_store %arg6[%c0_199, %c0_200, %c0_201], %581 {strides = array<i32>} : memref<1x32x128xf32, #tpu.memory_space<vmem>>, vector<1x32x128xf32>,
    return
  }
  func.func @transform_0(%arg0: i32) -> (i32, i32, i32) {
    %c0_i32 = arith.constant 0 : i32
    %c0_i32_0 = arith.constant 0 : i32
    %c0_i32_1 = arith.constant 0 : i32
    %c0_i32_2 = arith.constant 0 : i32
    return %c0_i32, %c0_i32_0, %c0_i32_1 : i32, i32, i32
  }
  func.func @transform_1(%arg0: i32) -> (i32, i32, i32) {
    %c0_i32 = arith.constant 0 : i32
    %c0_i32_0 = arith.constant 0 : i32
    %c0_i32_1 = arith.constant 0 : i32
    %c0_i32_2 = arith.constant 0 : i32
    return %c0_i32, %c0_i32_0, %c0_i32_1 : i32, i32, i32
  }
  func.func @transform_2(%arg0: i32) -> (i32, i32, i32) {
    %c0_i32 = arith.constant 0 : i32
    %c0_i32_0 = arith.constant 0 : i32
    %c0_i32_1 = arith.constant 0 : i32
    return %arg0, %c0_i32, %c0_i32_0 : i32, i32, i32
  }
  func.func @transform_3(%arg0: i32) -> (i32, i32, i32) {
    %c0_i32 = arith.constant 0 : i32
    %c0_i32_0 = arith.constant 0 : i32
    %c0_i32_1 = arith.constant 0 : i32
    return %arg0, %c0_i32, %c0_i32_0 : i32, i32, i32
  }
  func.func @transform_4(%arg0: i32) -> (i32, i32, i32) {
    %c0_i32 = arith.constant 0 : i32
    %c0_i32_0 = arith.constant 0 : i32
    %c0_i32_1 = arith.constant 0 : i32
    return %arg0, %c0_i32, %c0_i32_0 : i32, i32, i32
  }
  func.func @transform_5(%arg0: i32) -> (i32, i32, i32) {
    %c0_i32 = arith.constant 0 : i32
    %c0_i32_0 = arith.constant 0 : i32
    %c0_i32_1 = arith.constant 0 : i32
    return %arg0, %c0_i32, %c0_i32_0 : i32, i32, i32
  }
}

</mosaic_0001>

<llo_original>
// kernel: tpu_custom_call.1
$region0: #{tpu_custom_call.1}
  #allocation0 [shape = 'u32[]', space=smem, size = 0x4, offset = 0x4, fixed_abs, tag = 'smem constant byte address 0x4 - core index']
  #allocation1 [shape = 'u32[72,128]{1,0:T(1,128)}', space=vmem, size = 0x9000, scoped, tag = 'internal scratch']
  %s0 = inlined_call_operand.vmem [shape: f32[1,6,4], index: 0, kind: input, shape index: {}]
  %s1 = inlined_call_operand.vmem [shape: f32[1,6,4], index: 1, kind: input, shape index: {}]
  %s2 = inlined_call_operand.hbm [shape: f32[1,32,128], index: 2, kind: output, shape index: {0}]
  %s3 = inlined_call_operand.hbm [shape: f32[1,32,128], index: 3, kind: output, shape index: {1}]
  %s4 = inlined_call_operand.hbm [shape: f32[1,32,128], index: 4, kind: output, shape index: {2}]
  %s5 = inlined_call_operand.hbm [shape: f32[1,32,128], index: 5, kind: output, shape index: {3}]
  %6 = xla_tuple %s2, %s3, %s4, %s5
  %s7 = sld [smem:[#allocation0]]
  $region50: #{tpu_custom_call.1} parent=0
    _
  %s9 = ssub.s32 1, %s7
  %s10 = scalar_select 0, %s9, %s7
  $region1: #{tpu_custom_call.1} parent=0
    #allocation2 [shape = 'u8[4096]{0}', space=smem, size = 0x1000, scoped, tag = 'input window, operand 0, single buffered']
    #allocation3 [shape = 's32[1]{0}', space=sflag, size = 0x4, scoped, tag = 'scoped memory for tpu_custom_call.1']
    #allocation4 [shape = 's32[1]{0}', space=sflag, size = 0x4, scoped, tag = 'scoped memory for tpu_custom_call.1']
    #allocation5 [shape = 'u8[4096]{0}', space=smem, size = 0x1000, scoped, tag = 'input window, operand 1, single buffered']
    #allocation6 [shape = 's32[1]{0}', space=sflag, size = 0x4, scoped, tag = 'scoped memory for tpu_custom_call.1']
    #allocation7 [shape = 'u8[16384]{0}', space=vmem, size = 0x4000, scoped, tag = 'output window, operand 0, single buffered']
    #allocation8 [shape = 'u8[16384]{0}', space=vmem, size = 0x4000, scoped, tag = 'output window, operand 1, single buffered']
    #allocation9 [shape = 's32[1]{0}', space=sflag, size = 0x4, scoped, tag = 'scoped memory for tpu_custom_call.1']
    #allocation10 [shape = 'u8[16384]{0}', space=vmem, size = 0x4000, scoped, tag = 'output window, operand 2, single buffered']
    #allocation11 [shape = 'u8[16384]{0}', space=vmem, size = 0x4000, scoped, tag = 'output window, operand 3, single buffered']
    #allocation12 [shape = 's32[1]{0}', space=sflag, size = 0x4, scoped, tag = 'scoped memory for tpu_custom_call.1']
    %11 = vsyncpa [#allocation4], 0
    %12 = vsyncpa [#allocation6], 0
    %13 = vsyncpa [#allocation3], 0
    %14 = vsyncpa [#allocation9], 0
    %15 = vsyncpa [#allocation12], 0
    // Predicated region
    $region2: #{tpu_custom_call.1} parent=1 // pred_check
      _
    $region3: #{tpu_custom_call.1} parent=1 // pred_check_branch
      %17 = sbr.rel (0) target = $region5
    $region4: #{tpu_custom_call.1} parent=1 // pred_region
      %19 = vsyncadd [#allocation4], 0
      %s21 = sshll.u32 %s0, 4
      %s22 = int_to_ptr.vmem [resolvable:$true] %s21
      %24 = dma.vmem_to_smem %s22, 128, [#allocation2], [#allocation4]
    $region5: #{tpu_custom_call.1} parent=1 // pred_fallthru
      _
    // Predicated region
    $region6: #{tpu_custom_call.1} parent=1 // pred_check
      _
    $region7: #{tpu_custom_call.1} parent=1 // pred_check_branch
      %26 = sbr.rel (0) target = $region9
    $region8: #{tpu_custom_call.1} parent=1 // pred_region
      %28 = vsyncadd [#allocation6], 0
      %s30 = sshll.u32 %s1, 4
      %s31 = int_to_ptr.vmem [resolvable:$true] %s30
      %33 = dma.vmem_to_smem %s31, 128, [#allocation5], [#allocation6]
    $region9: #{tpu_custom_call.1} parent=1 // pred_fallthru
      _
    // Predicated region
    $region10: #{tpu_custom_call.1} parent=1 // pred_check
      _
    $region11: #{tpu_custom_call.1} parent=1 // pred_check_branch
      %35 = sbr.rel (0) target = $region13
    $region12: #{tpu_custom_call.1} parent=1 // pred_region
      %37 = dma.done [#allocation4], 128
    $region13: #{tpu_custom_call.1} parent=1 // pred_fallthru
      _
    // Predicated region
    $region14: #{tpu_custom_call.1} parent=1 // pred_check
      _
    $region15: #{tpu_custom_call.1} parent=1 // pred_check_branch
      %39 = sbr.rel (0) target = $region17
    $region16: #{tpu_custom_call.1} parent=1 // pred_region
      %41 = dma.done [#allocation6], 128
    $region17: #{tpu_custom_call.1} parent=1 // pred_fallthru
      _
    %42 = sfence
    %v43 = vlaneseq
    %v44 = vand.u32 %v43, 127
    %v45 = vlaneseq
    %v46 = vshrl.u32 %v45, 7
    %v47 = vadd.s32 %v46, 8
    %v48 = vadd.s32 %v46, 16
    %v49 = vadd.s32 %v46, 24
    %v50 = vshra.s32 %v44, 5
    %v51 = vand.u32 %v50, 1
    %vm52 = vcmp.ne.s32.totalorder %v51, 0
    %v53 = vshra.s32 %v46, 4
    %v54 = vshra.s32 %v47, 4
    %v55 = vshra.s32 %v48, 4
    %v56 = vshra.s32 %v49, 4
    %v57 = vand.u32 %v53, 1
    %v58 = vand.u32 %v54, 1
    %v59 = vand.u32 %v55, 1
    %v60 = vand.u32 %v56, 1
    %vm61 = vcmp.ne.s32.totalorder %v57, 0
    %vm62 = vcmp.ne.s32.totalorder %v58, 0
    %vm63 = vcmp.ne.s32.totalorder %v59, 0
    %vm64 = vcmp.ne.s32.totalorder %v60, 0
    %v65 = vsel %vm61, 1, 0
    %v66 = vsel %vm62, 1, 0
    %v67 = vsel %vm63, 1, 0
    %v68 = vsel %vm64, 1, 0
    %vm69 = vcmp.eq.s32.totalorder %v65, 1
    %vm70 = vcmp.eq.s32.totalorder %v66, 1
    %vm71 = vcmp.eq.s32.totalorder %v67, 1
    %vm72 = vcmp.eq.s32.totalorder %v68, 1
    %v73 = vsel %vm52, 1, 0
    %vm74 = vcmp.eq.s32.totalorder %v73, 1
    %vm75 = vmxor %vm69, %vm74
    %vm76 = vmxor %vm70, %vm74
    %vm77 = vmxor %vm71, %vm74
    %vm78 = vmxor %vm72, %vm74
    %vm79 = vmxor %vm75, 1
    %vm80 = vmxor %vm76, 1
    %vm81 = vmxor %vm77, 1
    %vm82 = vmxor %vm78, 1
    %s83 = smul.u32 0, 8
    %s84 = smul.u32 %s83, 128
    %s85 = sld [smem:[#allocation2 + %s84]]
    %s86 = sadd.s32 %s84, 1
    %s87 = sld [smem:[#allocation2 + %s86]]
    %s88 = sadd.s32 %s84, 2
    %s89 = sld [smem:[#allocation2 + %s88]]
    %s90 = sadd.s32 %s84, 3
    %s91 = sld [smem:[#allocation2 + %s90]]
    %s92 = sadd.f32 %s85, %s91
    %s93 = ssub.f32 %s85, %s91
    %s94 = ssub.f32 0.0, %s89
    %v95 = vstv %s93
    %v96 = vstv %s92
    %v97 = vsel %vm61, %v95, %v96
    %v98 = vsel %vm62, %v95, %v96
    %v99 = vsel %vm63, %v95, %v96
    %v100 = vsel %vm64, %v95, %v96
    %v101 = vstv %s89
    %v102 = vstv %s94
    %v103 = vsel %vm61, %v101, %v102
    %v104 = vsel %vm62, %v101, %v102
    %v105 = vsel %vm63, %v101, %v102
    %v106 = vsel %vm64, %v101, %v102
    %v107 = vstv %s87
    %v108 = vsel %vm79, %v97, %v107
    %v109 = vsel %vm80, %v98, %v107
    %v110 = vsel %vm81, %v99, %v107
    %v111 = vsel %vm82, %v100, %v107
    %v112 = vsel %vm79, 0.0, %v103
    %v113 = vsel %vm80, 0.0, %v104
    %v114 = vsel %vm81, 0.0, %v105
    %v115 = vsel %vm82, 0.0, %v106
    %v116 = vshra.s32 %v44, 4
    %v117 = vand.u32 %v116, 1
    %vm118 = vcmp.ne.s32.totalorder %v117, 0
    %v119 = vshra.s32 %v46, 3
    %v120 = vshra.s32 %v47, 3
    %v121 = vshra.s32 %v48, 3
    %v122 = vshra.s32 %v49, 3
    %v123 = vand.u32 %v119, 1
    %v124 = vand.u32 %v120, 1
    %v125 = vand.u32 %v121, 1
    %v126 = vand.u32 %v122, 1
    %vm127 = vcmp.ne.s32.totalorder %v123, 0
    %vm128 = vcmp.ne.s32.totalorder %v124, 0
    %vm129 = vcmp.ne.s32.totalorder %v125, 0
    %vm130 = vcmp.ne.s32.totalorder %v126, 0
    %v131 = vsel %vm127, 1, 0
    %v132 = vsel %vm128, 1, 0
    %v133 = vsel %vm129, 1, 0
    %v134 = vsel %vm130, 1, 0
    %vm135 = vcmp.eq.s32.totalorder %v131, 1
    %vm136 = vcmp.eq.s32.totalorder %v132, 1
    %vm137 = vcmp.eq.s32.totalorder %v133, 1
    %vm138 = vcmp.eq.s32.totalorder %v134, 1
    %v139 = vsel %vm118, 1, 0
    %vm140 = vcmp.eq.s32.totalorder %v139, 1
    %vm141 = vmxor %vm135, %vm140
    %vm142 = vmxor %vm136, %vm140
    %vm143 = vmxor %vm137, %vm140
    %vm144 = vmxor %vm138, %vm140
    %vm145 = vmxor %vm141, 1
    %vm146 = vmxor %vm142, 1
    %vm147 = vmxor %vm143, 1
    %vm148 = vmxor %vm144, 1
    %s149 = sadd.s32 1, %s83
    %s150 = smul.u32 %s149, 128
    %s151 = sld [smem:[#allocation2 + %s150]]
    %s152 = sadd.s32 %s150, 1
    %s153 = sld [smem:[#allocation2 + %s152]]
    %s154 = sadd.s32 %s150, 2
    %s155 = sld [smem:[#allocation2 + %s154]]
    %s156 = sadd.s32 %s150, 3
    %s157 = sld [smem:[#allocation2 + %s156]]
    %s158 = sadd.f32 %s151, %s157
    %s159 = ssub.f32 %s151, %s157
    %s160 = ssub.f32 0.0, %s155
    %v161 = vstv %s159
    %v162 = vstv %s158
    %v163 = vsel %vm127, %v161, %v162
    %v164 = vsel %vm128, %v161, %v162
    %v165 = vsel %vm129, %v161, %v162
    %v166 = vsel %vm130, %v161, %v162
    %v167 = vstv %s155
    %v168 = vstv %s160
    %v169 = vsel %vm127, %v167, %v168
    %v170 = vsel %vm128, %v167, %v168
    %v171 = vsel %vm129, %v167, %v168
    %v172 = vsel %vm130, %v167, %v168
    %v173 = vstv %s153
    %v174 = vsel %vm145, %v163, %v173
    %v175 = vsel %vm146, %v164, %v173
    %v176 = vsel %vm147, %v165, %v173
    %v177 = vsel %vm148, %v166, %v173
    %v178 = vsel %vm145, 0.0, %v169
    %v179 = vsel %vm146, 0.0, %v170
    %v180 = vsel %vm147, 0.0, %v171
    %v181 = vsel %vm148, 0.0, %v172
    %v182 = vmul.f32 %v108, %v174
    %v183 = vmul.f32 %v109, %v175
    %v184 = vmul.f32 %v110, %v176
    %v185 = vmul.f32 %v111, %v177
    %v186 = vmul.f32 %v112, %v178
    %v187 = vmul.f32 %v113, %v179
    %v188 = vmul.f32 %v114, %v180
    %v189 = vmul.f32 %v115, %v181
    %v190 = vsub.f32 %v182, %v186
    %v191 = vsub.f32 %v183, %v187
    %v192 = vsub.f32 %v184, %v188
    %v193 = vsub.f32 %v185, %v189
    %v194 = vmul.f32 %v108, %v178
    %v195 = vmul.f32 %v109, %v179
    %v196 = vmul.f32 %v110, %v180
    %v197 = vmul.f32 %v111, %v181
    %v198 = vmul.f32 %v112, %v174
    %v199 = vmul.f32 %v113, %v175
    %v200 = vmul.f32 %v114, %v176
    %v201 = vmul.f32 %v115, %v177
    %v202 = vadd.f32 %v194, %v198
    %v203 = vadd.f32 %v195, %v199
    %v204 = vadd.f32 %v196, %v200
    %v205 = vadd.f32 %v197, %v201
    %v206 = vshra.s32 %v44, 3
    %v207 = vand.u32 %v206, 1
    %vm208 = vcmp.ne.s32.totalorder %v207, 0
    %v209 = vshra.s32 %v46, 2
    %v210 = vshra.s32 %v47, 2
    %v211 = vshra.s32 %v48, 2
    %v212 = vshra.s32 %v49, 2
    %v213 = vand.u32 %v209, 1
    %v214 = vand.u32 %v210, 1
    %v215 = vand.u32 %v211, 1
    %v216 = vand.u32 %v212, 1
    %vm217 = vcmp.ne.s32.totalorder %v213, 0
    %vm218 = vcmp.ne.s32.totalorder %v214, 0
    %vm219 = vcmp.ne.s32.totalorder %v215, 0
    %vm220 = vcmp.ne.s32.totalorder %v216, 0
    %v221 = vsel %vm217, 1, 0
    %v222 = vsel %vm218, 1, 0
    %v223 = vsel %vm219, 1, 0
    %v224 = vsel %vm220, 1, 0
    %vm225 = vcmp.eq.s32.totalorder %v221, 1
    %vm226 = vcmp.eq.s32.totalorder %v222, 1
    %vm227 = vcmp.eq.s32.totalorder %v223, 1
    %vm228 = vcmp.eq.s32.totalorder %v224, 1
    %v229 = vsel %vm208, 1, 0
    %vm230 = vcmp.eq.s32.totalorder %v229, 1
    %vm231 = vmxor %vm225, %vm230
    %vm232 = vmxor %vm226, %vm230
    %vm233 = vmxor %vm227, %vm230
    %vm234 = vmxor %vm228, %vm230
    %vm235 = vmxor %vm231, 1
    %vm236 = vmxor %vm232, 1
    %vm237 = vmxor %vm233, 1
    %vm238 = vmxor %vm234, 1
    %s239 = sadd.s32 2, %s83
    %s240 = smul.u32 %s239, 128
    %s241 = sld [smem:[#allocation2 + %s240]]
    %s242 = sadd.s32 %s240, 1
    %s243 = sld [smem:[#allocation2 + %s242]]
    %s244 = sadd.s32 %s240, 2
    %s245 = sld [smem:[#allocation2 + %s244]]
    %s246 = sadd.s32 %s240, 3
    %s247 = sld [smem:[#allocation2 + %s246]]
    %s248 = sadd.f32 %s241, %s247
    %s249 = ssub.f32 %s241, %s247
    %s250 = ssub.f32 0.0, %s245
    %v251 = vstv %s249
    %v252 = vstv %s248
    %v253 = vsel %vm217, %v251, %v252
    %v254 = vsel %vm218, %v251, %v252
    %v255 = vsel %vm219, %v251, %v252
    %v256 = vsel %vm220, %v251, %v252
    %v257 = vstv %s245
    %v258 = vstv %s250
    %v259 = vsel %vm217, %v257, %v258
    %v260 = vsel %vm218, %v257, %v258
    %v261 = vsel %vm219, %v257, %v258
    %v262 = vsel %vm220, %v257, %v258
    %v263 = vstv %s243
    %v264 = vsel %vm235, %v253, %v263
    %v265 = vsel %vm236, %v254, %v263
    %v266 = vsel %vm237, %v255, %v263
    %v267 = vsel %vm238, %v256, %v263
    %v268 = vsel %vm235, 0.0, %v259
    %v269 = vsel %vm236, 0.0, %v260
    %v270 = vsel %vm237, 0.0, %v261
    %v271 = vsel %vm238, 0.0, %v262
    %v272 = vmul.f32 %v190, %v264
    %v273 = vmul.f32 %v191, %v265
    %v274 = vmul.f32 %v192, %v266
    %v275 = vmul.f32 %v193, %v267
    %v276 = vmul.f32 %v202, %v268
    %v277 = vmul.f32 %v203, %v269
    %v278 = vmul.f32 %v204, %v270
    %v279 = vmul.f32 %v205, %v271
    %v280 = vsub.f32 %v272, %v276
    %v281 = vsub.f32 %v273, %v277
    %v282 = vsub.f32 %v274, %v278
    %v283 = vsub.f32 %v275, %v279
    %v284 = vmul.f32 %v190, %v268
    %v285 = vmul.f32 %v191, %v269
    %v286 = vmul.f32 %v192, %v270
    %v287 = vmul.f32 %v193, %v271
    %v288 = vmul.f32 %v202, %v264
    %v289 = vmul.f32 %v203, %v265
    %v290 = vmul.f32 %v204, %v266
    %v291 = vmul.f32 %v205, %v267
    %v292 = vadd.f32 %v284, %v288
    %v293 = vadd.f32 %v285, %v289
    %v294 = vadd.f32 %v286, %v290
    %v295 = vadd.f32 %v287, %v291
    %v296 = vshra.s32 %v44, 2
    %v297 = vand.u32 %v296, 1
    %vm298 = vcmp.ne.s32.totalorder %v297, 0
    %v299 = vshra.s32 %v46, 1
    %v300 = vshra.s32 %v47, 1
    %v301 = vshra.s32 %v48, 1
    %v302 = vshra.s32 %v49, 1
    %v303 = vand.u32 %v299, 1
    %v304 = vand.u32 %v300, 1
    %v305 = vand.u32 %v301, 1
    %v306 = vand.u32 %v302, 1
    %vm307 = vcmp.ne.s32.totalorder %v303, 0
    %vm308 = vcmp.ne.s32.totalorder %v304, 0
    %vm309 = vcmp.ne.s32.totalorder %v305, 0
    %vm310 = vcmp.ne.s32.totalorder %v306, 0
    %v311 = vsel %vm307, 1, 0
    %v312 = vsel %vm308, 1, 0
    %v313 = vsel %vm309, 1, 0
    %v314 = vsel %vm310, 1, 0
    %vm315 = vcmp.eq.s32.totalorder %v311, 1
    %vm316 = vcmp.eq.s32.totalorder %v312, 1
    %vm317 = vcmp.eq.s32.totalorder %v313, 1
    %vm318 = vcmp.eq.s32.totalorder %v314, 1
    %v319 = vsel %vm298, 1, 0
    %vm320 = vcmp.eq.s32.totalorder %v319, 1
    %vm321 = vmxor %vm315, %vm320
    %vm322 = vmxor %vm316, %vm320
    %vm323 = vmxor %vm317, %vm320
    %vm324 = vmxor %vm318, %vm320
    %vm325 = vmxor %vm321, 1
    %vm326 = vmxor %vm322, 1
    %vm327 = vmxor %vm323, 1
    %vm328 = vmxor %vm324, 1
    %s329 = sadd.s32 3, %s83
    %s330 = smul.u32 %s329, 128
    %s331 = sld [smem:[#allocation2 + %s330]]
    %s332 = sadd.s32 %s330, 1
    %s333 = sld [smem:[#allocation2 + %s332]]
    %s334 = sadd.s32 %s330, 2
    %s335 = sld [smem:[#allocation2 + %s334]]
    %s336 = sadd.s32 %s330, 3
    %s337 = sld [smem:[#allocation2 + %s336]]
    %s338 = sadd.f32 %s331, %s337
    %s339 = ssub.f32 %s331, %s337
    %s340 = ssub.f32 0.0, %s335
    %v341 = vstv %s339
    %v342 = vstv %s338
    %v343 = vsel %vm307, %v341, %v342
    %v344 = vsel %vm308, %v341, %v342
    %v345 = vsel %vm309, %v341, %v342
    %v346 = vsel %vm310, %v341, %v342
    %v347 = vstv %s335
    %v348 = vstv %s340
    %v349 = vsel %vm307, %v347, %v348
    %v350 = vsel %vm308, %v347, %v348
    %v351 = vsel %vm309, %v347, %v348
    %v352 = vsel %vm310, %v347, %v348
    %v353 = vstv %s333
    %v354 = vsel %vm325, %v343, %v353
    %v355 = vsel %vm326, %v344, %v353
    %v356 = vsel %vm327, %v345, %v353
    %v357 = vsel %vm328, %v346, %v353
    %v358 = vsel %vm325, 0.0, %v349
    %v359 = vsel %vm326, 0.0, %v350
    %v360 = vsel %vm327, 0.0, %v351
    %v361 = vsel %vm328, 0.0, %v352
    %v362 = vmul.f32 %v280, %v354
    %v363 = vmul.f32 %v281, %v355
    %v364 = vmul.f32 %v282, %v356
    %v365 = vmul.f32 %v283, %v357
    %v366 = vmul.f32 %v292, %v358
    %v367 = vmul.f32 %v293, %v359
    %v368 = vmul.f32 %v294, %v360
    %v369 = vmul.f32 %v295, %v361
    %v370 = vsub.f32 %v362, %v366
    %v371 = vsub.f32 %v363, %v367
    %v372 = vsub.f32 %v364, %v368
    %v373 = vsub.f32 %v365, %v369
    %v374 = vmul.f32 %v280, %v358
    %v375 = vmul.f32 %v281, %v359
    %v376 = vmul.f32 %v282, %v360
    %v377 = vmul.f32 %v283, %v361
    %v378 = vmul.f32 %v292, %v354
    %v379 = vmul.f32 %v293, %v355
    %v380 = vmul.f32 %v294, %v356
    %v381 = vmul.f32 %v295, %v357
    %v382 = vadd.f32 %v374, %v378
    %v383 = vadd.f32 %v375, %v379
    %v384 = vadd.f32 %v376, %v380
    %v385 = vadd.f32 %v377, %v381
    %v386 = vshra.s32 %v44, 1
    %v387 = vand.u32 %v386, 1
    %vm388 = vcmp.ne.s32.totalorder %v387, 0
    %v389 = vand.u32 %v46, 1
    %v390 = vand.u32 %v47, 1
    %v391 = vand.u32 %v48, 1
    %v392 = vand.u32 %v49, 1
    %vm393 = vcmp.ne.s32.totalorder %v389, 0
    %vm394 = vcmp.ne.s32.totalorder %v390, 0
    %vm395 = vcmp.ne.s32.totalorder %v391, 0
    %vm396 = vcmp.ne.s32.totalorder %v392, 0
    %v397 = vsel %vm393, 1, 0
    %v398 = vsel %vm394, 1, 0
    %v399 = vsel %vm395, 1, 0
    %v400 = vsel %vm396, 1, 0
    %vm401 = vcmp.eq.s32.totalorder %v397, 1
    %vm402 = vcmp.eq.s32.totalorder %v398, 1
    %vm403 = vcmp.eq.s32.totalorder %v399, 1
    %vm404 = vcmp.eq.s32.totalorder %v400, 1
    %v405 = vsel %vm388, 1, 0
    %vm406 = vcmp.eq.s32.totalorder %v405, 1
    %vm407 = vmxor %vm401, %vm406
    %vm408 = vmxor %vm402, %vm406
    %vm409 = vmxor %vm403, %vm406
    %vm410 = vmxor %vm404, %vm406
    %vm411 = vmxor %vm407, 1
    %vm412 = vmxor %vm408, 1
    %vm413 = vmxor %vm409, 1
    %vm414 = vmxor %vm410, 1
    %s415 = sadd.s32 4, %s83
    %s416 = smul.u32 %s415, 128
    %s417 = sld [smem:[#allocation2 + %s416]]
    %s418 = sadd.s32 %s416, 1
    %s419 = sld [smem:[#allocation2 + %s418]]
    %s420 = sadd.s32 %s416, 2
    %s421 = sld [smem:[#allocation2 + %s420]]
    %s422 = sadd.s32 %s416, 3
    %s423 = sld [smem:[#allocation2 + %s422]]
    %s424 = sadd.f32 %s417, %s423
    %s425 = ssub.f32 %s417, %s423
    %s426 = ssub.f32 0.0, %s421
    %v427 = vstv %s425
    %v428 = vstv %s424
    %v429 = vsel %vm393, %v427, %v428
    %v430 = vsel %vm394, %v427, %v428
    %v431 = vsel %vm395, %v427, %v428
    %v432 = vsel %vm396, %v427, %v428
    %v433 = vstv %s421
    %v434 = vstv %s426
    %v435 = vsel %vm393, %v433, %v434
    %v436 = vsel %vm394, %v433, %v434
    %v437 = vsel %vm395, %v433, %v434
    %v438 = vsel %vm396, %v433, %v434
    %v439 = vstv %s419
    %v440 = vsel %vm411, %v429, %v439
    %v441 = vsel %vm412, %v430, %v439
    %v442 = vsel %vm413, %v431, %v439
    %v443 = vsel %vm414, %v432, %v439
    %v444 = vsel %vm411, 0.0, %v435
    %v445 = vsel %vm412, 0.0, %v436
    %v446 = vsel %vm413, 0.0, %v437
    %v447 = vsel %vm414, 0.0, %v438
    %v448 = vmul.f32 %v370, %v440
    %v449 = vmul.f32 %v371, %v441
    %v450 = vmul.f32 %v372, %v442
    %v451 = vmul.f32 %v373, %v443
    %v452 = vmul.f32 %v382, %v444
    %v453 = vmul.f32 %v383, %v445
    %v454 = vmul.f32 %v384, %v446
    %v455 = vmul.f32 %v385, %v447
    %v456 = vsub.f32 %v448, %v452
    %v457 = vsub.f32 %v449, %v453
    %v458 = vsub.f32 %v450, %v454
    %v459 = vsub.f32 %v451, %v455
    %v460 = vmul.f32 %v370, %v444
    %v461 = vmul.f32 %v371, %v445
    %v462 = vmul.f32 %v372, %v446
    %v463 = vmul.f32 %v373, %v447
    %v464 = vmul.f32 %v382, %v440
    %v465 = vmul.f32 %v383, %v441
    %v466 = vmul.f32 %v384, %v442
    %v467 = vmul.f32 %v385, %v443
    %v468 = vadd.f32 %v460, %v464
    %v469 = vadd.f32 %v461, %v465
    %v470 = vadd.f32 %v462, %v466
    %v471 = vadd.f32 %v463, %v467
    %v472 = vand.u32 %v44, 1
    %vm473 = vcmp.ne.s32.totalorder %v472, 0
    %v474 = vshra.s32 %v44, 6
    %v475 = vand.u32 %v474, 1
    %vm476 = vcmp.ne.s32.totalorder %v475, 0
    %vm477 = vmxor %vm476, %vm473
    %vm478 = vmxor %vm477, 1
    %s479 = sadd.s32 5, %s83
    %s480 = smul.u32 %s479, 128
    %s481 = sld [smem:[#allocation2 + %s480]]
    %s482 = sadd.s32 %s480, 1
    %s483 = sld [smem:[#allocation2 + %s482]]
    %s484 = sadd.s32 %s480, 2
    %s485 = sld [smem:[#allocation2 + %s484]]
    %s486 = sadd.s32 %s480, 3
    %s487 = sld [smem:[#allocation2 + %s486]]
    %s488 = sadd.f32 %s481, %s487
    %s489 = ssub.f32 %s481, %s487
    %s490 = ssub.f32 0.0, %s485
    %v491 = vstv %s489
    %v492 = vstv %s488
    %v493 = vsel %vm476, %v491, %v492
    %v494 = vstv %s485
    %v495 = vstv %s490
    %v496 = vsel %vm476, %v494, %v495
    %v497 = vstv %s483
    %v498 = vsel %vm478, %v493, %v497
    %v499 = vsel %vm478, 0.0, %v496
    %v500 = vmul.f32 %v456, %v498
    %v501 = vmul.f32 %v457, %v498
    %v502 = vmul.f32 %v458, %v498
    %v503 = vmul.f32 %v459, %v498
    %v504 = vmul.f32 %v468, %v499
    %v505 = vmul.f32 %v469, %v499
    %v506 = vmul.f32 %v470, %v499
    %v507 = vmul.f32 %v471, %v499
    %v508 = vsub.f32 %v500, %v504
    %v509 = vsub.f32 %v501, %v505
    %v510 = vsub.f32 %v502, %v506
    %v511 = vsub.f32 %v503, %v507
    %v512 = vmul.f32 %v456, %v499
    %v513 = vmul.f32 %v457, %v499
    %v514 = vmul.f32 %v458, %v499
    %v515 = vmul.f32 %v459, %v499
    %v516 = vmul.f32 %v468, %v498
    %v517 = vmul.f32 %v469, %v498
    %v518 = vmul.f32 %v470, %v498
    %v519 = vmul.f32 %v471, %v498
    %v520 = vadd.f32 %v512, %v516
    %v521 = vadd.f32 %v513, %v517
    %v522 = vadd.f32 %v514, %v518
    %v523 = vadd.f32 %v515, %v519
    %524 = vst [vmem:[#allocation7] sm:$0xff] %v508
    %525 = vst [vmem:[#allocation7 + $0x8] sm:$0xff] %v509
    %526 = vst [vmem:[#allocation7 + $0x10] sm:$0xff] %v510
    %527 = vst [vmem:[#allocation7 + $0x18] sm:$0xff] %v511
    %528 = vst [vmem:[#allocation8] sm:$0xff] %v520
    %529 = vst [vmem:[#allocation8 + $0x8] sm:$0xff] %v521
    %530 = vst [vmem:[#allocation8 + $0x10] sm:$0xff] %v522
    %531 = vst [vmem:[#allocation8 + $0x18] sm:$0xff] %v523
    %s532 = sld [smem:[#allocation5 + %s84]]
    %s533 = sld [smem:[#allocation5 + %s86]]
    %s534 = sld [smem:[#allocation5 + %s88]]
    %s535 = sld [smem:[#allocation5 + %s90]]
    %s536 = sadd.f32 %s532, %s535
    %s537 = ssub.f32 %s532, %s535
    %s538 = ssub.f32 0.0, %s534
    %v539 = vstv %s537
    %v540 = vstv %s536
    %v541 = vsel %vm61, %v539, %v540
    %v542 = vsel %vm62, %v539, %v540
    %v543 = vsel %vm63, %v539, %v540
    %v544 = vsel %vm64, %v539, %v540
    %v545 = vstv %s534
    %v546 = vstv %s538
    %v547 = vsel %vm61, %v545, %v546
    %v548 = vsel %vm62, %v545, %v546
    %v549 = vsel %vm63, %v545, %v546
    %v550 = vsel %vm64, %v545, %v546
    %v551 = vstv %s533
    %v552 = vsel %vm79, %v541, %v551
    %v553 = vsel %vm80, %v542, %v551
    %v554 = vsel %vm81, %v543, %v551
    %v555 = vsel %vm82, %v544, %v551
    %v556 = vsel %vm79, 0.0, %v547
    %v557 = vsel %vm80, 0.0, %v548
    %v558 = vsel %vm81, 0.0, %v549
    %v559 = vsel %vm82, 0.0, %v550
    %s560 = sld [smem:[#allocation5 + %s150]]
    %s561 = sld [smem:[#allocation5 + %s152]]
    %s562 = sld [smem:[#allocation5 + %s154]]
    %s563 = sld [smem:[#allocation5 + %s156]]
    %s564 = sadd.f32 %s560, %s563
    %s565 = ssub.f32 %s560, %s563
    %s566 = ssub.f32 0.0, %s562
    %v567 = vstv %s565
    %v568 = vstv %s564
    %v569 = vsel %vm127, %v567, %v568
    %v570 = vsel %vm128, %v567, %v568
    %v571 = vsel %vm129, %v567, %v568
    %v572 = vsel %vm130, %v567, %v568
    %v573 = vstv %s562
    %v574 = vstv %s566
    %v575 = vsel %vm127, %v573, %v574
    %v576 = vsel %vm128, %v573, %v574
    %v577 = vsel %vm129, %v573, %v574
    %v578 = vsel %vm130, %v573, %v574
    %v579 = vstv %s561
    %v580 = vsel %vm145, %v569, %v579
    %v581 = vsel %vm146, %v570, %v579
    %v582 = vsel %vm147, %v571, %v579
    %v583 = vsel %vm148, %v572, %v579
    %v584 = vsel %vm145, 0.0, %v575
    %v585 = vsel %vm146, 0.0, %v576
    %v586 = vsel %vm147, 0.0, %v577
    %v587 = vsel %vm148, 0.0, %v578
    %v588 = vmul.f32 %v552, %v580
    %v589 = vmul.f32 %v553, %v581
    %v590 = vmul.f32 %v554, %v582
    %v591 = vmul.f32 %v555, %v583
    %v592 = vmul.f32 %v556, %v584
    %v593 = vmul.f32 %v557, %v585
    %v594 = vmul.f32 %v558, %v586
    %v595 = vmul.f32 %v559, %v587
    %v596 = vsub.f32 %v588, %v592
    %v597 = vsub.f32 %v589, %v593
    %v598 = vsub.f32 %v590, %v594
    %v599 = vsub.f32 %v591, %v595
    %v600 = vmul.f32 %v552, %v584
    %v601 = vmul.f32 %v553, %v585
    %v602 = vmul.f32 %v554, %v586
    %v603 = vmul.f32 %v555, %v587
    %v604 = vmul.f32 %v556, %v580
    %v605 = vmul.f32 %v557, %v581
    %v606 = vmul.f32 %v558, %v582
    %v607 = vmul.f32 %v559, %v583
    %v608 = vadd.f32 %v600, %v604
    %v609 = vadd.f32 %v601, %v605
    %v610 = vadd.f32 %v602, %v606
    %v611 = vadd.f32 %v603, %v607
    %s612 = sld [smem:[#allocation5 + %s240]]
    %s613 = sld [smem:[#allocation5 + %s242]]
    %s614 = sld [smem:[#allocation5 + %s244]]
    %s615 = sld [smem:[#allocation5 + %s246]]
    %s616 = sadd.f32 %s612, %s615
    %s617 = ssub.f32 %s612, %s615
    %s618 = ssub.f32 0.0, %s614
    %v619 = vstv %s617
    %v620 = vstv %s616
    %v621 = vsel %vm217, %v619, %v620
    %v622 = vsel %vm218, %v619, %v620
    %v623 = vsel %vm219, %v619, %v620
    %v624 = vsel %vm220, %v619, %v620
    %v625 = vstv %s614
    %v626 = vstv %s618
    %v627 = vsel %vm217, %v625, %v626
    %v628 = vsel %vm218, %v625, %v626
    %v629 = vsel %vm219, %v625, %v626
    %v630 = vsel %vm220, %v625, %v626
    %v631 = vstv %s613
    %v632 = vsel %vm235, %v621, %v631
    %v633 = vsel %vm236, %v622, %v631
    %v634 = vsel %vm237, %v623, %v631
    %v635 = vsel %vm238, %v624, %v631
    %v636 = vsel %vm235, 0.0, %v627
    %v637 = vsel %vm236, 0.0, %v628
    %v638 = vsel %vm237, 0.0, %v629
    %v639 = vsel %vm238, 0.0, %v630
    %v640 = vmul.f32 %v596, %v632
    %v641 = vmul.f32 %v597, %v633
    %v642 = vmul.f32 %v598, %v634
    %v643 = vmul.f32 %v599, %v635
    %v644 = vmul.f32 %v608, %v636
    %v645 = vmul.f32 %v609, %v637
    %v646 = vmul.f32 %v610, %v638
    %v647 = vmul.f32 %v611, %v639
    %v648 = vsub.f32 %v640, %v644
    %v649 = vsub.f32 %v641, %v645
    %v650 = vsub.f32 %v642, %v646
    %v651 = vsub.f32 %v643, %v647
    %v652 = vmul.f32 %v596, %v636
    %v653 = vmul.f32 %v597, %v637
    %v654 = vmul.f32 %v598, %v638
    %v655 = vmul.f32 %v599, %v639
    %v656 = vmul.f32 %v608, %v632
    %v657 = vmul.f32 %v609, %v633
    %v658 = vmul.f32 %v610, %v634
    %v659 = vmul.f32 %v611, %v635
    %v660 = vadd.f32 %v652, %v656
    %v661 = vadd.f32 %v653, %v657
    %v662 = vadd.f32 %v654, %v658
    %v663 = vadd.f32 %v655, %v659
    %s664 = sld [smem:[#allocation5 + %s330]]
    %s665 = sld [smem:[#allocation5 + %s332]]
    %s666 = sld [smem:[#allocation5 + %s334]]
    %s667 = sld [smem:[#allocation5 + %s336]]
    %s668 = sadd.f32 %s664, %s667
    %s669 = ssub.f32 %s664, %s667
    %s670 = ssub.f32 0.0, %s666
    %v671 = vstv %s669
    %v672 = vstv %s668
    %v673 = vsel %vm307, %v671, %v672
    %v674 = vsel %vm308, %v671, %v672
    %v675 = vsel %vm309, %v671, %v672
    %v676 = vsel %vm310, %v671, %v672
    %v677 = vstv %s666
    %v678 = vstv %s670
    %v679 = vsel %vm307, %v677, %v678
    %v680 = vsel %vm308, %v677, %v678
    %v681 = vsel %vm309, %v677, %v678
    %v682 = vsel %vm310, %v677, %v678
    %v683 = vstv %s665
    %v684 = vsel %vm325, %v673, %v683
    %v685 = vsel %vm326, %v674, %v683
    %v686 = vsel %vm327, %v675, %v683
    %v687 = vsel %vm328, %v676, %v683
    %v688 = vsel %vm325, 0.0, %v679
    %v689 = vsel %vm326, 0.0, %v680
    %v690 = vsel %vm327, 0.0, %v681
    %v691 = vsel %vm328, 0.0, %v682
    %v692 = vmul.f32 %v648, %v684
    %v693 = vmul.f32 %v649, %v685
    %v694 = vmul.f32 %v650, %v686
    %v695 = vmul.f32 %v651, %v687
    %v696 = vmul.f32 %v660, %v688
    %v697 = vmul.f32 %v661, %v689
    %v698 = vmul.f32 %v662, %v690
    %v699 = vmul.f32 %v663, %v691
    %v700 = vsub.f32 %v692, %v696
    %v701 = vsub.f32 %v693, %v697
    %v702 = vsub.f32 %v694, %v698
    %v703 = vsub.f32 %v695, %v699
    %v704 = vmul.f32 %v648, %v688
    %v705 = vmul.f32 %v649, %v689
    %v706 = vmul.f32 %v650, %v690
    %v707 = vmul.f32 %v651, %v691
    %v708 = vmul.f32 %v660, %v684
    %v709 = vmul.f32 %v661, %v685
    %v710 = vmul.f32 %v662, %v686
    %v711 = vmul.f32 %v663, %v687
    %v712 = vadd.f32 %v704, %v708
    %v713 = vadd.f32 %v705, %v709
    %v714 = vadd.f32 %v706, %v710
    %v715 = vadd.f32 %v707, %v711
    %s716 = sld [smem:[#allocation5 + %s416]]
    %s717 = sld [smem:[#allocation5 + %s418]]
    %s718 = sld [smem:[#allocation5 + %s420]]
    %s719 = sld [smem:[#allocation5 + %s422]]
    %s720 = sadd.f32 %s716, %s719
    %s721 = ssub.f32 %s716, %s719
    %s722 = ssub.f32 0.0, %s718
    %v723 = vstv %s721
    %v724 = vstv %s720
    %v725 = vsel %vm393, %v723, %v724
    %v726 = vsel %vm394, %v723, %v724
    %v727 = vsel %vm395, %v723, %v724
    %v728 = vsel %vm396, %v723, %v724
    %v729 = vstv %s718
    %v730 = vstv %s722
    %v731 = vsel %vm393, %v729, %v730
    %v732 = vsel %vm394, %v729, %v730
    %v733 = vsel %vm395, %v729, %v730
    %v734 = vsel %vm396, %v729, %v730
    %v735 = vstv %s717
    %v736 = vsel %vm411, %v725, %v735
    %v737 = vsel %vm412, %v726, %v735
    %v738 = vsel %vm413, %v727, %v735
    %v739 = vsel %vm414, %v728, %v735
    %v740 = vsel %vm411, 0.0, %v731
    %v741 = vsel %vm412, 0.0, %v732
    %v742 = vsel %vm413, 0.0, %v733
    %v743 = vsel %vm414, 0.0, %v734
    %v744 = vmul.f32 %v700, %v736
    %v745 = vmul.f32 %v701, %v737
    %v746 = vmul.f32 %v702, %v738
    %v747 = vmul.f32 %v703, %v739
    %v748 = vmul.f32 %v712, %v740
    %v749 = vmul.f32 %v713, %v741
    %v750 = vmul.f32 %v714, %v742
    %v751 = vmul.f32 %v715, %v743
    %v752 = vsub.f32 %v744, %v748
    %v753 = vsub.f32 %v745, %v749
    %v754 = vsub.f32 %v746, %v750
    %v755 = vsub.f32 %v747, %v751
    %v756 = vmul.f32 %v700, %v740
    %v757 = vmul.f32 %v701, %v741
    %v758 = vmul.f32 %v702, %v742
    %v759 = vmul.f32 %v703, %v743
    %v760 = vmul.f32 %v712, %v736
    %v761 = vmul.f32 %v713, %v737
    %v762 = vmul.f32 %v714, %v738
    %v763 = vmul.f32 %v715, %v739
    %v764 = vadd.f32 %v756, %v760
    %v765 = vadd.f32 %v757, %v761
    %v766 = vadd.f32 %v758, %v762
    %v767 = vadd.f32 %v759, %v763
    %s768 = sld [smem:[#allocation5 + %s480]]
    %s769 = sld [smem:[#allocation5 + %s482]]
    %s770 = sld [smem:[#allocation5 + %s484]]
    %s771 = sld [smem:[#allocation5 + %s486]]
    %s772 = sadd.f32 %s768, %s771
    %s773 = ssub.f32 %s768, %s771
    %s774 = ssub.f32 0.0, %s770
    %v775 = vstv %s773
    %v776 = vstv %s772
    %v777 = vsel %vm476, %v775, %v776
    %v778 = vstv %s770
    %v779 = vstv %s774
    %v780 = vsel %vm476, %v778, %v779
    %v781 = vstv %s769
    %v782 = vsel %vm478, %v777, %v781
    %v783 = vsel %vm478, 0.0, %v780
    %v784 = vmul.f32 %v752, %v782
    %v785 = vmul.f32 %v753, %v782
    %v786 = vmul.f32 %v754, %v782
    %v787 = vmul.f32 %v755, %v782
    %v788 = vmul.f32 %v764, %v783
    %v789 = vmul.f32 %v765, %v783
    %v790 = vmul.f32 %v766, %v783
    %v791 = vmul.f32 %v767, %v783
    %v792 = vsub.f32 %v784, %v788
    %v793 = vsub.f32 %v785, %v789
    %v794 = vsub.f32 %v786, %v790
    %v795 = vsub.f32 %v787, %v791
    %v796 = vmul.f32 %v752, %v783
    %v797 = vmul.f32 %v753, %v783
    %v798 = vmul.f32 %v754, %v783
    %v799 = vmul.f32 %v755, %v783
    %v800 = vmul.f32 %v764, %v782
    %v801 = vmul.f32 %v765, %v782
    %v802 = vmul.f32 %v766, %v782
    %v803 = vmul.f32 %v767, %v782
    %v804 = vadd.f32 %v796, %v800
    %v805 = vadd.f32 %v797, %v801
    %v806 = vadd.f32 %v798, %v802
    %v807 = vadd.f32 %v799, %v803
    %808 = vst [vmem:[#allocation10] sm:$0xff] %v792
    %809 = vst [vmem:[#allocation10 + $0x8] sm:$0xff] %v793
    %810 = vst [vmem:[#allocation10 + $0x10] sm:$0xff] %v794
    %811 = vst [vmem:[#allocation10 + $0x18] sm:$0xff] %v795
    %812 = vst [vmem:[#allocation11] sm:$0xff] %v804
    %813 = vst [vmem:[#allocation11 + $0x8] sm:$0xff] %v805
    %814 = vst [vmem:[#allocation11 + $0x10] sm:$0xff] %v806
    %815 = vst [vmem:[#allocation11 + $0x18] sm:$0xff] %v807
    // Predicated region
    $region18: #{tpu_custom_call.1} parent=1 // pred_check
      _
    $region19: #{tpu_custom_call.1} parent=1 // pred_check_branch
      %817 = sbr.rel (0) target = $region21
    $region20: #{tpu_custom_call.1} parent=1 // pred_region
      %819 = vsyncadd [#allocation3], 0
      %s820 = sshll.u32 [#allocation7], 4
      %s821 = int_to_ptr.vmem [resolvable:$true] %s820
      %s822 = sshll.u32 %s2, 4
      %s823 = int_to_ptr.hbm [resolvable:$true] %s822
      %828 = dma.vmem_to_hbm [thread:$0]  %s821, 512, %s823, [#allocation3], 128, 128, 8
    $region21: #{tpu_custom_call.1} parent=1 // pred_fallthru
      _
    // Predicated region
    $region22: #{tpu_custom_call.1} parent=1 // pred_check
      _
    $region23: #{tpu_custom_call.1} parent=1 // pred_check_branch
      %830 = sbr.rel (0) target = $region25
    $region24: #{tpu_custom_call.1} parent=1 // pred_region
      %832 = vsyncadd [#allocation9], 0
      %s833 = sshll.u32 [#allocation8], 4
      %s834 = int_to_ptr.vmem [resolvable:$true] %s833
      %s835 = sshll.u32 %s3, 4
      %s836 = int_to_ptr.hbm [resolvable:$true] %s835
      %841 = dma.vmem_to_hbm [thread:$0]  %s834, 512, %s836, [#allocation9], 128, 128, 8
    $region25: #{tpu_custom_call.1} parent=1 // pred_fallthru
      _
    // Predicated region
    $region26: #{tpu_custom_call.1} parent=1 // pred_check
      _
    $region27: #{tpu_custom_call.1} parent=1 // pred_check_branch
      %843 = sbr.rel (0) target = $region29
    $region28: #{tpu_custom_call.1} parent=1 // pred_region
      %845 = vsyncadd [#allocation9], 0
      %s846 = sshll.u32 [#allocation10], 4
      %s847 = int_to_ptr.vmem [resolvable:$true] %s846
      %s848 = sshll.u32 %s4, 4
      %s849 = int_to_ptr.hbm [resolvable:$true] %s848
      %854 = dma.vmem_to_hbm [thread:$0]  %s847, 512, %s849, [#allocation9], 128, 128, 8
    $region29: #{tpu_custom_call.1} parent=1 // pred_fallthru
      _
    // Predicated region
    $region30: #{tpu_custom_call.1} parent=1 // pred_check
      _
    $region31: #{tpu_custom_call.1} parent=1 // pred_check_branch
      %856 = sbr.rel (0) target = $region33
    $region32: #{tpu_custom_call.1} parent=1 // pred_region
      %858 = vsyncadd [#allocation12], 0
      %s859 = sshll.u32 [#allocation11], 4
      %s860 = int_to_ptr.vmem [resolvable:$true] %s859
      %s861 = sshll.u32 %s5, 4
      %s862 = int_to_ptr.hbm [resolvable:$true] %s861
      %867 = dma.vmem_to_hbm [thread:$0]  %s860, 512, %s862, [#allocation12], 128, 128, 8
    $region33: #{tpu_custom_call.1} parent=1 // pred_fallthru
      _
    // Predicated region
    $region34: #{tpu_custom_call.1} parent=1 // pred_check
      _
    $region35: #{tpu_custom_call.1} parent=1 // pred_check_branch
      %869 = sbr.rel (0) target = $region37
    $region36: #{tpu_custom_call.1} parent=1 // pred_region
      %871 = dma.done [#allocation3], 512
    $region37: #{tpu_custom_call.1} parent=1 // pred_fallthru
      _
    // Predicated region
    $region38: #{tpu_custom_call.1} parent=1 // pred_check
      _
    $region39: #{tpu_custom_call.1} parent=1 // pred_check_branch
      %873 = sbr.rel (0) target = $region41
    $region40: #{tpu_custom_call.1} parent=1 // pred_region
      %875 = dma.done [#allocation9], 512
    $region41: #{tpu_custom_call.1} parent=1 // pred_fallthru
      _
    // Predicated region
    $region42: #{tpu_custom_call.1} parent=1 // pred_check
      _
    $region43: #{tpu_custom_call.1} parent=1 // pred_check_branch
      %877 = sbr.rel (0) target = $region45
    $region44: #{tpu_custom_call.1} parent=1 // pred_region
      %879 = dma.done [#allocation9], 512
    $region45: #{tpu_custom_call.1} parent=1 // pred_fallthru
      _
    // Predicated region
    $region46: #{tpu_custom_call.1} parent=1 // pred_check
      _
    $region47: #{tpu_custom_call.1} parent=1 // pred_check_branch
      %881 = sbr.rel (0) target = $region49
    $region48: #{tpu_custom_call.1} parent=1 // pred_region
      %883 = dma.done [#allocation12], 512
    $region49: #{tpu_custom_call.1} parent=1 // pred_fallthru
      _
    %884 = vsyncpa [#allocation3], 1
    %885 = vsyncpa [#allocation9], 1
    %886 = vsyncpa [#allocation12], 1
    %887 = vsyncpa [#allocation4], 1
    %888 = vsyncpa [#allocation6], 1

</llo_original>
